<compile_context>
chip_gen: v5e
topology: v5e:2x2
jax: 0.10.0
libtpu: 0.0.40
codegen_flags: <defaults>
</compile_context>

<pallas_src>
import jax
import jax.numpy as jnp
from jax.experimental import pallas as pl
from jax.experimental.pallas import tpu as pltpu


def _gate_pitch(hidden_size):
    # Per-gate column pitch, rounded up to a whole number of 128-lane vregs.
    return ((hidden_size + 127) // 128) * 128


def lstm_kernel(xg_ref, len_ref, whh_ref, b_ref, h_out_ref):
    """Full LSTM recurrence in one invocation.

    xg_ref  : (T, B, 4*GP) f32  precomputed x_t @ W_ih^T (gate-column padded)
    len_ref : (B, 1)       i32  sequence lengths
    whh_ref : (H, 4*GP)    f32  W_hh^T (gate-column padded)
    b_ref   : (1, 4*GP)    f32  b_ih + b_hh (gate-column padded)
    h_out   : (B, H)       f32  final hidden state h_{len-1} per row
    """
    T, B, _ = xg_ref.shape
    H = h_out_ref.shape[-1]
    GP = whh_ref.shape[-1] // 4

    whh = whh_ref[...]           # (H, 4*GP), resident for the whole loop
    bias = b_ref[...]            # (1, 4*GP)
    lens = len_ref[...]          # (B, 1)

    def step(t, carry):
        h, c = carry
        # The recurrent h @ W_hh^T is the only MXU op left on the serial critical path.
        gates = (xg_ref[t]
                 + jnp.dot(h, whh, preferred_element_type=jnp.float32)
                 + bias)                                       # (B, 4*GP)
        # Gate slices start at 128-lane-aligned offsets -> no cross-vreg shuffles.
        i_g = jax.nn.sigmoid(gates[:, 0 * GP:0 * GP + H])
        f_g = jax.nn.sigmoid(gates[:, 1 * GP:1 * GP + H])
        g_g = jnp.tanh(gates[:, 2 * GP:2 * GP + H])
        o_g = jax.nn.sigmoid(gates[:, 3 * GP:3 * GP + H])
        c_new = f_g * c + i_g * g_g
        h_new = o_g * jnp.tanh(c_new)
        # pack_padded_sequence: freeze state once t >= length for that row.
        mask = t < lens                                        # (B, 1) bool
        h = jnp.where(mask, h_new, h)
        c = jnp.where(mask, c_new, c)
        return h, c

    h0 = jnp.zeros((B, H), jnp.float32)
    c0 = jnp.zeros((B, H), jnp.float32)
    # Unrolled so the LLO scheduler can interleave step t+1's MXU push under step t's
    # EUP transcendentals; h/c stay in vregs as loop carries (no VMEM state scratch).
    h_final, _ = jax.lax.fori_loop(0, T, step, (h0, c0), unroll=True)
    h_out_ref[...] = h_final


def lstm_model_forward(tokens, lengths, params):
    """tokens: (B, T) int32; lengths: (B,) int32. Returns (B, 1) f32 in [0,1]."""
    emb_table = params["emb"]          # (V, E)  (PAD row already zero)
    wih_t_p = params["wih_t_p"]        # (E, 4*GP)
    whh_t_p = params["whh_t_p"]        # (H, 4*GP)
    b_p = params["b_p"]                # (1, 4*GP)
    wfc_t = params["wfc_t"]            # (H, 1)
    bfc = params["bfc"]                # (1, 1)

    B, T = tokens.shape
    H = whh_t_p.shape[0]

    # Hoisted input projection: one (V,E)@(E,4GP) matmul, then a time-major gather
    # straight from token ids (no (B,T,E) activation intermediate, no transpose).
    gate_tab = jnp.dot(emb_table, wih_t_p,
                       preferred_element_type=jnp.float32)     # (V, 4*GP)
    xg = gate_tab[tokens.T]                                    # (T, B, 4*GP)
    len2d = lengths.reshape(B, 1).astype(jnp.int32)

    # TODO(synk): for production B/T/H, tile batch over a "parallel" grid axis
    # (2 TCs on v7x), chunk T with an in-kernel pipeline, store W_hh^T in bf16
    # (keep f32 accumulation/state), and set vmem_limit_bytes for the 64 MiB v7x budget.
    vmem = pltpu.MemorySpace.VMEM
    h_final = pl.pallas_call(
        lstm_kernel,
        out_shape=jax.ShapeDtypeStruct((B, H), jnp.float32),
        in_specs=[
            pl.BlockSpec(memory_space=vmem),   # xg       (T, B, 4*GP)
            pl.BlockSpec(memory_space=vmem),   # lengths  (B, 1)
            pl.BlockSpec(memory_space=vmem),   # W_hh^T   (H, 4*GP)
            pl.BlockSpec(memory_space=vmem),   # bias     (1, 4*GP)
        ],
        out_specs=pl.BlockSpec(memory_space=vmem),
    )(xg, len2d, whh_t_p, b_p)

    # Tiny (H,1) projection + sigmoid in glue: avoids a 1-lane (masked-store) kernel
    # output and an N=1 MXU matmul inside the kernel.
    return jax.nn.sigmoid(jnp.dot(h_final, wfc_t) + bfc)


def ref_forward(tokens, lengths, params):
    """Pure-JAX reference of the PyTorch forward (unpadded weights), for validation."""
    emb = params["emb"][tokens]                     # (B, T, E)
    B, T, _ = emb.shape
    H = params["whh_t"].shape[0]
    h = jnp.zeros((B, H), jnp.float32)
    c = jnp.zeros((B, H), jnp.float32)
    for t in range(T):
        x_t = emb[:, t, :]
        gates = x_t @ params["wih_t"] + h @ params["whh_t"] + params["b"]
        i_g = jax.nn.sigmoid(gates[:, 0 * H:1 * H])
        f_g = jax.nn.sigmoid(gates[:, 1 * H:2 * H])
        g_g = jnp.tanh(gates[:, 2 * H:3 * H])
        o_g = jax.nn.sigmoid(gates[:, 3 * H:4 * H])
        c_new = f_g * c + i_g * g_g
        h_new = o_g * jnp.tanh(c_new)
        mask = (t < lengths)[:, None]
        h = jnp.where(mask, h_new, h)
        c = jnp.where(mask, c_new, c)
    return jax.nn.sigmoid(h @ params["wfc_t"] + params["bfc"])


def _pad_gate_cols(w_t, hidden_size, gate_pitch):
    """(rows, 4H) -> (rows, 4*GP); gate k occupies columns [k*GP, k*GP + H)."""
    rows = w_t.shape[0]
    out = jnp.zeros((rows, 4 * gate_pitch), w_t.dtype)
    for k in range(4):
        out = out.at[:, k * gate_pitch:k * gate_pitch + hidden_size].set(
            w_t[:, k * hidden_size:(k + 1) * hidden_size])
    return out


def make_params(key, vocab_size, embedding_dim, hidden_size, output_size, pad_idx):
    E, H, O = embedding_dim, hidden_size, output_size
    GP = _gate_pitch(H)
    k = jax.random.split(key, 7)
    s = 1.0 / jnp.sqrt(H)
    emb = jax.random.normal(k[0], (vocab_size, E), jnp.float32)
    emb = emb.at[pad_idx].set(0.0)                        # padding_idx row is zero
    w_ih = jax.random.uniform(k[1], (4 * H, E), jnp.float32, -s, s)
    w_hh = jax.random.uniform(k[2], (4 * H, H), jnp.float32, -s, s)
    b_ih = jax.random.uniform(k[3], (4 * H,), jnp.float32, -s, s)
    b_hh = jax.random.uniform(k[4], (4 * H,), jnp.float32, -s, s)
    w_fc = jax.random.uniform(k[5], (O, H), jnp.float32, -s, s)
    b_fc = jax.random.uniform(k[6], (O,), jnp.float32, -s, s)

    wih_t = w_ih.T                                        # (E, 4H)
    whh_t = w_hh.T                                        # (H, 4H)
    b = (b_ih + b_hh).reshape(1, 4 * H)                   # (1, 4H)
    return {
        "emb": emb,
        # unpadded (PyTorch) layout — used by the pure-JAX reference
        "wih_t": wih_t,
        "whh_t": whh_t,
        "b": b,
        # lane-aligned layout used by the Pallas kernel (per-gate pitch = 128 lanes)
        "wih_t_p": _pad_gate_cols(wih_t, H, GP),          # (E, 4*GP)
        "whh_t_p": _pad_gate_cols(whh_t, H, GP),          # (H, 4*GP)
        "b_p": _pad_gate_cols(b, H, GP),                  # (1, 4*GP)
        "wfc_t": w_fc.T,                                  # (H, 1)
        "bfc": b_fc.reshape(1, O),                        # (1, 1)
    }


if __name__ == "__main__":
    embedding_dim = 8
    hidden_size = 64
    output_size = 1
    vocab_size = 20
    PAD_IDX = 0
    B, T = 2, 8

    key = jax.random.PRNGKey(0)
    kp, kt = jax.random.split(key)
    params = make_params(kp, vocab_size, embedding_dim, hidden_size,
                         output_size, PAD_IDX)

    # lengths sorted descending (pack_padded_sequence enforce_sorted=True)
    lengths = jnp.array([8, 5], dtype=jnp.int32)
    tokens = jax.random.randint(kt, (B, T), 1, vocab_size, dtype=jnp.int32)
    # zero-pad past each sequence's length with PAD_IDX
    pos = jnp.arange(T)[None, :]
    tokens = jnp.where(pos < lengths[:, None], tokens, PAD_IDX)

    out = lstm_model_forward(tokens, lengths, params)
    out = jax.block_until_ready(out)

    ref = ref_forward(tokens, lengths, params)
    assert out.shape == (B, 1)
    assert jnp.allclose(out, ref, rtol=1e-5, atol=1e-5), (out, ref)

    print("KERNEL_OK")
</pallas_src>

<mosaic_0001>
module attributes {stable_mosaic.version = 11 : i64} {
  func.func @lstm_kernel(%arg0: memref<8x2x512xf32, #tpu.memory_space<vmem>>, %arg1: memref<2x1xi32, #tpu.memory_space<vmem>>, %arg2: memref<64x512xf32, #tpu.memory_space<vmem>>, %arg3: memref<1x512xf32, #tpu.memory_space<vmem>>, %arg4: memref<2x64xf32, #tpu.memory_space<vmem>>) attributes {dimension_semantics = [], scalar_prefetch = 0 : i64, scratch_operands = 0 : i64, tpu.core_type = #tpu.core_type<tc>} {
    %c0 = arith.constant 0 : index
    %c0_0 = arith.constant 0 : index
    %0 = vector.load %arg2[%c0, %c0_0] : memref<64x512xf32, #tpu.memory_space<vmem>>, vector<64x512xf32>
    %c0_1 = arith.constant 0 : index
    %c0_2 = arith.constant 0 : index
    %1 = vector.load %arg3[%c0_1, %c0_2] : memref<1x512xf32, #tpu.memory_space<vmem>>, vector<1x512xf32>
    %c0_3 = arith.constant 0 : index
    %c0_4 = arith.constant 0 : index
    %2 = vector.load %arg1[%c0_3, %c0_4] : memref<2x1xi32, #tpu.memory_space<vmem>>, vector<2x1xi32>
    %cst = arith.constant 0.000000e+00 : f32
    %3 = vector.broadcast %cst : f32 to vector<2x64xf32>
    %cst_5 = arith.constant 0.000000e+00 : f32
    %4 = vector.broadcast %cst_5 : f32 to vector<2x64xf32>
    %c0_i32 = arith.constant 0 : i32
    %5 = arith.index_cast %c0_i32 : i32 to index
    %c0_6 = arith.constant 0 : index
    %c0_7 = arith.constant 0 : index
    %6 = vector.load %arg0[%5, %c0_6, %c0_7] : memref<8x2x512xf32, #tpu.memory_space<vmem>>, vector<1x2x512xf32>
    %7 = vector.shape_cast %6 : vector<1x2x512xf32> to vector<2x512xf32>
    %cst_8 = arith.constant dense<0.000000e+00> : vector<2x512xf32>
    %8 = tpu.matmul %3, %0, %cst_8 {dimension_numbers = #tpu.dot_dimension_numbers<[1], [0], [0], [1], [0, 0, 1, 1], [], []>} : vector<2x64xf32>, vector<64x512xf32>, vector<2x512xf32> -> vector<2x512xf32>
    %9 = arith.addf %7, %8 : vector<2x512xf32>
    %10 = vector.broadcast %1 : vector<1x512xf32> to vector<2x512xf32>
    %11 = arith.addf %9, %10 : vector<2x512xf32>
    %12 = vector.extract_strided_slice %11 {offsets = [0, 0], sizes = [2, 64], strides = [1, 1]} : vector<2x512xf32> to vector<2x64xf32>
    %13 = arith.negf %12 : vector<2x64xf32>
    %14 = math.exp %13 : vector<2x64xf32>
    %cst_9 = arith.constant 1.000000e+00 : f32
    %15 = vector.broadcast %cst_9 : f32 to vector<2x64xf32>
    %16 = arith.addf %15, %14 : vector<2x64xf32>
    %17 = arith.divf %15, %16 : vector<2x64xf32>
    %18 = vector.extract_strided_slice %11 {offsets = [0, 128], sizes = [2, 64], strides = [1, 1]} : vector<2x512xf32> to vector<2x64xf32>
    %19 = arith.negf %18 : vector<2x64xf32>
    %20 = math.exp %19 : vector<2x64xf32>
    %cst_10 = arith.constant 1.000000e+00 : f32
    %21 = vector.broadcast %cst_10 : f32 to vector<2x64xf32>
    %22 = arith.addf %21, %20 : vector<2x64xf32>
    %23 = arith.divf %21, %22 : vector<2x64xf32>
    %24 = vector.extract_strided_slice %11 {offsets = [0, 256], sizes = [2, 64], strides = [1, 1]} : vector<2x512xf32> to vector<2x64xf32>
    %25 = math.tanh %24 : vector<2x64xf32>
    %26 = vector.extract_strided_slice %11 {offsets = [0, 384], sizes = [2, 64], strides = [1, 1]} : vector<2x512xf32> to vector<2x64xf32>
    %27 = arith.negf %26 : vector<2x64xf32>
    %28 = math.exp %27 : vector<2x64xf32>
    %cst_11 = arith.constant 1.000000e+00 : f32
    %29 = vector.broadcast %cst_11 : f32 to vector<2x64xf32>
    %30 = arith.addf %29, %28 : vector<2x64xf32>
    %31 = arith.divf %29, %30 : vector<2x64xf32>
    %32 = arith.mulf %23, %4 : vector<2x64xf32>
    %33 = arith.mulf %17, %25 : vector<2x64xf32>
    %34 = arith.addf %32, %33 : vector<2x64xf32>
    %35 = math.tanh %34 : vector<2x64xf32>
    %36 = arith.mulf %31, %35 : vector<2x64xf32>
    %37 = vector.broadcast %c0_i32 : i32 to vector<2x1xi32>
    %38 = arith.cmpi slt, %37, %2 : vector<2x1xi32>
    %39 = vector.shape_cast %38 : vector<2x1xi1> to vector<2x1xi1>
    %40 = vector.broadcast %39 : vector<2x1xi1> to vector<2x64xi1>
    %41 = arith.select %40, %36, %3 : vector<2x64xi1>, vector<2x64xf32>
    %42 = vector.shape_cast %38 : vector<2x1xi1> to vector<2x1xi1>
    %43 = vector.broadcast %42 : vector<2x1xi1> to vector<2x64xi1>
    %44 = arith.select %43, %34, %4 : vector<2x64xi1>, vector<2x64xf32>
    %c1_i32 = arith.constant 1 : i32
    %45 = arith.index_cast %c1_i32 : i32 to index
    %c0_12 = arith.constant 0 : index
    %c0_13 = arith.constant 0 : index
    %46 = vector.load %arg0[%45, %c0_12, %c0_13] : memref<8x2x512xf32, #tpu.memory_space<vmem>>, vector<1x2x512xf32>
    %47 = vector.shape_cast %46 : vector<1x2x512xf32> to vector<2x512xf32>
    %cst_14 = arith.constant dense<0.000000e+00> : vector<2x512xf32>
    %48 = tpu.matmul %41, %0, %cst_14 {dimension_numbers = #tpu.dot_dimension_numbers<[1], [0], [0], [1], [0, 0, 1, 1], [], []>} : vector<2x64xf32>, vector<64x512xf32>, vector<2x512xf32> -> vector<2x512xf32>
    %49 = arith.addf %47, %48 : vector<2x512xf32>
    %50 = vector.broadcast %1 : vector<1x512xf32> to vector<2x512xf32>
    %51 = arith.addf %49, %50 : vector<2x512xf32>
    %52 = vector.extract_strided_slice %51 {offsets = [0, 0], sizes = [2, 64], strides = [1, 1]} : vector<2x512xf32> to vector<2x64xf32>
    %53 = arith.negf %52 : vector<2x64xf32>
    %54 = math.exp %53 : vector<2x64xf32>
    %cst_15 = arith.constant 1.000000e+00 : f32
    %55 = vector.broadcast %cst_15 : f32 to vector<2x64xf32>
    %56 = arith.addf %55, %54 : vector<2x64xf32>
    %57 = arith.divf %55, %56 : vector<2x64xf32>
    %58 = vector.extract_strided_slice %51 {offsets = [0, 128], sizes = [2, 64], strides = [1, 1]} : vector<2x512xf32> to vector<2x64xf32>
    %59 = arith.negf %58 : vector<2x64xf32>
    %60 = math.exp %59 : vector<2x64xf32>
    %cst_16 = arith.constant 1.000000e+00 : f32
    %61 = vector.broadcast %cst_16 : f32 to vector<2x64xf32>
    %62 = arith.addf %61, %60 : vector<2x64xf32>
    %63 = arith.divf %61, %62 : vector<2x64xf32>
    %64 = vector.extract_strided_slice %51 {offsets = [0, 256], sizes = [2, 64], strides = [1, 1]} : vector<2x512xf32> to vector<2x64xf32>
    %65 = math.tanh %64 : vector<2x64xf32>
    %66 = vector.extract_strided_slice %51 {offsets = [0, 384], sizes = [2, 64], strides = [1, 1]} : vector<2x512xf32> to vector<2x64xf32>
    %67 = arith.negf %66 : vector<2x64xf32>
    %68 = math.exp %67 : vector<2x64xf32>
    %cst_17 = arith.constant 1.000000e+00 : f32
    %69 = vector.broadcast %cst_17 : f32 to vector<2x64xf32>
    %70 = arith.addf %69, %68 : vector<2x64xf32>
    %71 = arith.divf %69, %70 : vector<2x64xf32>
    %72 = arith.mulf %63, %44 : vector<2x64xf32>
    %73 = arith.mulf %57, %65 : vector<2x64xf32>
    %74 = arith.addf %72, %73 : vector<2x64xf32>
    %75 = math.tanh %74 : vector<2x64xf32>
    %76 = arith.mulf %71, %75 : vector<2x64xf32>
    %77 = vector.broadcast %c1_i32 : i32 to vector<2x1xi32>
    %78 = arith.cmpi slt, %77, %2 : vector<2x1xi32>
    %79 = vector.shape_cast %78 : vector<2x1xi1> to vector<2x1xi1>
    %80 = vector.broadcast %79 : vector<2x1xi1> to vector<2x64xi1>
    %81 = arith.select %80, %76, %41 : vector<2x64xi1>, vector<2x64xf32>
    %82 = vector.shape_cast %78 : vector<2x1xi1> to vector<2x1xi1>
    %83 = vector.broadcast %82 : vector<2x1xi1> to vector<2x64xi1>
    %84 = arith.select %83, %74, %44 : vector<2x64xi1>, vector<2x64xf32>
    %c2_i32 = arith.constant 2 : i32
    %85 = arith.index_cast %c2_i32 : i32 to index
    %c0_18 = arith.constant 0 : index
    %c0_19 = arith.constant 0 : index
    %86 = vector.load %arg0[%85, %c0_18, %c0_19] : memref<8x2x512xf32, #tpu.memory_space<vmem>>, vector<1x2x512xf32>
    %87 = vector.shape_cast %86 : vector<1x2x512xf32> to vector<2x512xf32>
    %cst_20 = arith.constant dense<0.000000e+00> : vector<2x512xf32>
    %88 = tpu.matmul %81, %0, %cst_20 {dimension_numbers = #tpu.dot_dimension_numbers<[1], [0], [0], [1], [0, 0, 1, 1], [], []>} : vector<2x64xf32>, vector<64x512xf32>, vector<2x512xf32> -> vector<2x512xf32>
    %89 = arith.addf %87, %88 : vector<2x512xf32>
    %90 = vector.broadcast %1 : vector<1x512xf32> to vector<2x512xf32>
    %91 = arith.addf %89, %90 : vector<2x512xf32>
    %92 = vector.extract_strided_slice %91 {offsets = [0, 0], sizes = [2, 64], strides = [1, 1]} : vector<2x512xf32> to vector<2x64xf32>
    %93 = arith.negf %92 : vector<2x64xf32>
    %94 = math.exp %93 : vector<2x64xf32>
    %cst_21 = arith.constant 1.000000e+00 : f32
    %95 = vector.broadcast %cst_21 : f32 to vector<2x64xf32>
    %96 = arith.addf %95, %94 : vector<2x64xf32>
    %97 = arith.divf %95, %96 : vector<2x64xf32>
    %98 = vector.extract_strided_slice %91 {offsets = [0, 128], sizes = [2, 64], strides = [1, 1]} : vector<2x512xf32> to vector<2x64xf32>
    %99 = arith.negf %98 : vector<2x64xf32>
    %100 = math.exp %99 : vector<2x64xf32>
    %cst_22 = arith.constant 1.000000e+00 : f32
    %101 = vector.broadcast %cst_22 : f32 to vector<2x64xf32>
    %102 = arith.addf %101, %100 : vector<2x64xf32>
    %103 = arith.divf %101, %102 : vector<2x64xf32>
    %104 = vector.extract_strided_slice %91 {offsets = [0, 256], sizes = [2, 64], strides = [1, 1]} : vector<2x512xf32> to vector<2x64xf32>
    %105 = math.tanh %104 : vector<2x64xf32>
    %106 = vector.extract_strided_slice %91 {offsets = [0, 384], sizes = [2, 64], strides = [1, 1]} : vector<2x512xf32> to vector<2x64xf32>
    %107 = arith.negf %106 : vector<2x64xf32>
    %108 = math.exp %107 : vector<2x64xf32>
    %cst_23 = arith.constant 1.000000e+00 : f32
    %109 = vector.broadcast %cst_23 : f32 to vector<2x64xf32>
    %110 = arith.addf %109, %108 : vector<2x64xf32>
    %111 = arith.divf %109, %110 : vector<2x64xf32>
    %112 = arith.mulf %103, %84 : vector<2x64xf32>
    %113 = arith.mulf %97, %105 : vector<2x64xf32>
    %114 = arith.addf %112, %113 : vector<2x64xf32>
    %115 = math.tanh %114 : vector<2x64xf32>
    %116 = arith.mulf %111, %115 : vector<2x64xf32>
    %117 = vector.broadcast %c2_i32 : i32 to vector<2x1xi32>
    %118 = arith.cmpi slt, %117, %2 : vector<2x1xi32>
    %119 = vector.shape_cast %118 : vector<2x1xi1> to vector<2x1xi1>
    %120 = vector.broadcast %119 : vector<2x1xi1> to vector<2x64xi1>
    %121 = arith.select %120, %116, %81 : vector<2x64xi1>, vector<2x64xf32>
    %122 = vector.shape_cast %118 : vector<2x1xi1> to vector<2x1xi1>
    %123 = vector.broadcast %122 : vector<2x1xi1> to vector<2x64xi1>
    %124 = arith.select %123, %114, %84 : vector<2x64xi1>, vector<2x64xf32>
    %c3_i32 = arith.constant 3 : i32
    %125 = arith.index_cast %c3_i32 : i32 to index
    %c0_24 = arith.constant 0 : index
    %c0_25 = arith.constant 0 : index
    %126 = vector.load %arg0[%125, %c0_24, %c0_25] : memref<8x2x512xf32, #tpu.memory_space<vmem>>, vector<1x2x512xf32>
    %127 = vector.shape_cast %126 : vector<1x2x512xf32> to vector<2x512xf32>
    %cst_26 = arith.constant dense<0.000000e+00> : vector<2x512xf32>
    %128 = tpu.matmul %121, %0, %cst_26 {dimension_numbers = #tpu.dot_dimension_numbers<[1], [0], [0], [1], [0, 0, 1, 1], [], []>} : vector<2x64xf32>, vector<64x512xf32>, vector<2x512xf32> -> vector<2x512xf32>
    %129 = arith.addf %127, %128 : vector<2x512xf32>
    %130 = vector.broadcast %1 : vector<1x512xf32> to vector<2x512xf32>
    %131 = arith.addf %129, %130 : vector<2x512xf32>
    %132 = vector.extract_strided_slice %131 {offsets = [0, 0], sizes = [2, 64], strides = [1, 1]} : vector<2x512xf32> to vector<2x64xf32>
    %133 = arith.negf %132 : vector<2x64xf32>
    %134 = math.exp %133 : vector<2x64xf32>
    %cst_27 = arith.constant 1.000000e+00 : f32
    %135 = vector.broadcast %cst_27 : f32 to vector<2x64xf32>
    %136 = arith.addf %135, %134 : vector<2x64xf32>
    %137 = arith.divf %135, %136 : vector<2x64xf32>
    %138 = vector.extract_strided_slice %131 {offsets = [0, 128], sizes = [2, 64], strides = [1, 1]} : vector<2x512xf32> to vector<2x64xf32>
    %139 = arith.negf %138 : vector<2x64xf32>
    %140 = math.exp %139 : vector<2x64xf32>
    %cst_28 = arith.constant 1.000000e+00 : f32
    %141 = vector.broadcast %cst_28 : f32 to vector<2x64xf32>
    %142 = arith.addf %141, %140 : vector<2x64xf32>
    %143 = arith.divf %141, %142 : vector<2x64xf32>
    %144 = vector.extract_strided_slice %131 {offsets = [0, 256], sizes = [2, 64], strides = [1, 1]} : vector<2x512xf32> to vector<2x64xf32>
    %145 = math.tanh %144 : vector<2x64xf32>
    %146 = vector.extract_strided_slice %131 {offsets = [0, 384], sizes = [2, 64], strides = [1, 1]} : vector<2x512xf32> to vector<2x64xf32>
    %147 = arith.negf %146 : vector<2x64xf32>
    %148 = math.exp %147 : vector<2x64xf32>
    %cst_29 = arith.constant 1.000000e+00 : f32
    %149 = vector.broadcast %cst_29 : f32 to vector<2x64xf32>
    %150 = arith.addf %149, %148 : vector<2x64xf32>
    %151 = arith.divf %149, %150 : vector<2x64xf32>
    %152 = arith.mulf %143, %124 : vector<2x64xf32>
    %153 = arith.mulf %137, %145 : vector<2x64xf32>
    %154 = arith.addf %152, %153 : vector<2x64xf32>
    %155 = math.tanh %154 : vector<2x64xf32>
    %156 = arith.mulf %151, %155 : vector<2x64xf32>
    %157 = vector.broadcast %c3_i32 : i32 to vector<2x1xi32>
    %158 = arith.cmpi slt, %157, %2 : vector<2x1xi32>
    %159 = vector.shape_cast %158 : vector<2x1xi1> to vector<2x1xi1>
    %160 = vector.broadcast %159 : vector<2x1xi1> to vector<2x64xi1>
    %161 = arith.select %160, %156, %121 : vector<2x64xi1>, vector<2x64xf32>
    %162 = vector.shape_cast %158 : vector<2x1xi1> to vector<2x1xi1>
    %163 = vector.broadcast %162 : vector<2x1xi1> to vector<2x64xi1>
    %164 = arith.select %163, %154, %124 : vector<2x64xi1>, vector<2x64xf32>
    %c4_i32 = arith.constant 4 : i32
    %165 = arith.index_cast %c4_i32 : i32 to index
    %c0_30 = arith.constant 0 : index
    %c0_31 = arith.constant 0 : index
    %166 = vector.load %arg0[%165, %c0_30, %c0_31] : memref<8x2x512xf32, #tpu.memory_space<vmem>>, vector<1x2x512xf32>
    %167 = vector.shape_cast %166 : vector<1x2x512xf32> to vector<2x512xf32>
    %cst_32 = arith.constant dense<0.000000e+00> : vector<2x512xf32>
    %168 = tpu.matmul %161, %0, %cst_32 {dimension_numbers = #tpu.dot_dimension_numbers<[1], [0], [0], [1], [0, 0, 1, 1], [], []>} : vector<2x64xf32>, vector<64x512xf32>, vector<2x512xf32> -> vector<2x512xf32>
    %169 = arith.addf %167, %168 : vector<2x512xf32>
    %170 = vector.broadcast %1 : vector<1x512xf32> to vector<2x512xf32>
    %171 = arith.addf %169, %170 : vector<2x512xf32>
    %172 = vector.extract_strided_slice %171 {offsets = [0, 0], sizes = [2, 64], strides = [1, 1]} : vector<2x512xf32> to vector<2x64xf32>
    %173 = arith.negf %172 : vector<2x64xf32>
    %174 = math.exp %173 : vector<2x64xf32>
    %cst_33 = arith.constant 1.000000e+00 : f32
    %175 = vector.broadcast %cst_33 : f32 to vector<2x64xf32>
    %176 = arith.addf %175, %174 : vector<2x64xf32>
    %177 = arith.divf %175, %176 : vector<2x64xf32>
    %178 = vector.extract_strided_slice %171 {offsets = [0, 128], sizes = [2, 64], strides = [1, 1]} : vector<2x512xf32> to vector<2x64xf32>
    %179 = arith.negf %178 : vector<2x64xf32>
    %180 = math.exp %179 : vector<2x64xf32>
    %cst_34 = arith.constant 1.000000e+00 : f32
    %181 = vector.broadcast %cst_34 : f32 to vector<2x64xf32>
    %182 = arith.addf %181, %180 : vector<2x64xf32>
    %183 = arith.divf %181, %182 : vector<2x64xf32>
    %184 = vector.extract_strided_slice %171 {offsets = [0, 256], sizes = [2, 64], strides = [1, 1]} : vector<2x512xf32> to vector<2x64xf32>
    %185 = math.tanh %184 : vector<2x64xf32>
    %186 = vector.extract_strided_slice %171 {offsets = [0, 384], sizes = [2, 64], strides = [1, 1]} : vector<2x512xf32> to vector<2x64xf32>
    %187 = arith.negf %186 : vector<2x64xf32>
    %188 = math.exp %187 : vector<2x64xf32>
    %cst_35 = arith.constant 1.000000e+00 : f32
    %189 = vector.broadcast %cst_35 : f32 to vector<2x64xf32>
    %190 = arith.addf %189, %188 : vector<2x64xf32>
    %191 = arith.divf %189, %190 : vector<2x64xf32>
    %192 = arith.mulf %183, %164 : vector<2x64xf32>
    %193 = arith.mulf %177, %185 : vector<2x64xf32>
    %194 = arith.addf %192, %193 : vector<2x64xf32>
    %195 = math.tanh %194 : vector<2x64xf32>
    %196 = arith.mulf %191, %195 : vector<2x64xf32>
    %197 = vector.broadcast %c4_i32 : i32 to vector<2x1xi32>
    %198 = arith.cmpi slt, %197, %2 : vector<2x1xi32>
    %199 = vector.shape_cast %198 : vector<2x1xi1> to vector<2x1xi1>
    %200 = vector.broadcast %199 : vector<2x1xi1> to vector<2x64xi1>
    %201 = arith.select %200, %196, %161 : vector<2x64xi1>, vector<2x64xf32>
    %202 = vector.shape_cast %198 : vector<2x1xi1> to vector<2x1xi1>
    %203 = vector.broadcast %202 : vector<2x1xi1> to vector<2x64xi1>
    %204 = arith.select %203, %194, %164 : vector<2x64xi1>, vector<2x64xf32>
    %c5_i32 = arith.constant 5 : i32
    %205 = arith.index_cast %c5_i32 : i32 to index
    %c0_36 = arith.constant 0 : index
    %c0_37 = arith.constant 0 : index
    %206 = vector.load %arg0[%205, %c0_36, %c0_37] : memref<8x2x512xf32, #tpu.memory_space<vmem>>, vector<1x2x512xf32>
    %207 = vector.shape_cast %206 : vector<1x2x512xf32> to vector<2x512xf32>
    %cst_38 = arith.constant dense<0.000000e+00> : vector<2x512xf32>
    %208 = tpu.matmul %201, %0, %cst_38 {dimension_numbers = #tpu.dot_dimension_numbers<[1], [0], [0], [1], [0, 0, 1, 1], [], []>} : vector<2x64xf32>, vector<64x512xf32>, vector<2x512xf32> -> vector<2x512xf32>
    %209 = arith.addf %207, %208 : vector<2x512xf32>
    %210 = vector.broadcast %1 : vector<1x512xf32> to vector<2x512xf32>
    %211 = arith.addf %209, %210 : vector<2x512xf32>
    %212 = vector.extract_strided_slice %211 {offsets = [0, 0], sizes = [2, 64], strides = [1, 1]} : vector<2x512xf32> to vector<2x64xf32>
    %213 = arith.negf %212 : vector<2x64xf32>
    %214 = math.exp %213 : vector<2x64xf32>
    %cst_39 = arith.constant 1.000000e+00 : f32
    %215 = vector.broadcast %cst_39 : f32 to vector<2x64xf32>
    %216 = arith.addf %215, %214 : vector<2x64xf32>
    %217 = arith.divf %215, %216 : vector<2x64xf32>
    %218 = vector.extract_strided_slice %211 {offsets = [0, 128], sizes = [2, 64], strides = [1, 1]} : vector<2x512xf32> to vector<2x64xf32>
    %219 = arith.negf %218 : vector<2x64xf32>
    %220 = math.exp %219 : vector<2x64xf32>
    %cst_40 = arith.constant 1.000000e+00 : f32
    %221 = vector.broadcast %cst_40 : f32 to vector<2x64xf32>
    %222 = arith.addf %221, %220 : vector<2x64xf32>
    %223 = arith.divf %221, %222 : vector<2x64xf32>
    %224 = vector.extract_strided_slice %211 {offsets = [0, 256], sizes = [2, 64], strides = [1, 1]} : vector<2x512xf32> to vector<2x64xf32>
    %225 = math.tanh %224 : vector<2x64xf32>
    %226 = vector.extract_strided_slice %211 {offsets = [0, 384], sizes = [2, 64], strides = [1, 1]} : vector<2x512xf32> to vector<2x64xf32>
    %227 = arith.negf %226 : vector<2x64xf32>
    %228 = math.exp %227 : vector<2x64xf32>
    %cst_41 = arith.constant 1.000000e+00 : f32
    %229 = vector.broadcast %cst_41 : f32 to vector<2x64xf32>
    %230 = arith.addf %229, %228 : vector<2x64xf32>
    %231 = arith.divf %229, %230 : vector<2x64xf32>
    %232 = arith.mulf %223, %204 : vector<2x64xf32>
    %233 = arith.mulf %217, %225 : vector<2x64xf32>
    %234 = arith.addf %232, %233 : vector<2x64xf32>
    %235 = math.tanh %234 : vector<2x64xf32>
    %236 = arith.mulf %231, %235 : vector<2x64xf32>
    %237 = vector.broadcast %c5_i32 : i32 to vector<2x1xi32>
    %238 = arith.cmpi slt, %237, %2 : vector<2x1xi32>
    %239 = vector.shape_cast %238 : vector<2x1xi1> to vector<2x1xi1>
    %240 = vector.broadcast %239 : vector<2x1xi1> to vector<2x64xi1>
    %241 = arith.select %240, %236, %201 : vector<2x64xi1>, vector<2x64xf32>
    %242 = vector.shape_cast %238 : vector<2x1xi1> to vector<2x1xi1>
    %243 = vector.broadcast %242 : vector<2x1xi1> to vector<2x64xi1>
    %244 = arith.select %243, %234, %204 : vector<2x64xi1>, vector<2x64xf32>
    %c6_i32 = arith.constant 6 : i32
    %245 = arith.index_cast %c6_i32 : i32 to index
    %c0_42 = arith.constant 0 : index
    %c0_43 = arith.constant 0 : index
    %246 = vector.load %arg0[%245, %c0_42, %c0_43] : memref<8x2x512xf32, #tpu.memory_space<vmem>>, vector<1x2x512xf32>
    %247 = vector.shape_cast %246 : vector<1x2x512xf32> to vector<2x512xf32>
    %cst_44 = arith.constant dense<0.000000e+00> : vector<2x512xf32>
    %248 = tpu.matmul %241, %0, %cst_44 {dimension_numbers = #tpu.dot_dimension_numbers<[1], [0], [0], [1], [0, 0, 1, 1], [], []>} : vector<2x64xf32>, vector<64x512xf32>, vector<2x512xf32> -> vector<2x512xf32>
    %249 = arith.addf %247, %248 : vector<2x512xf32>
    %250 = vector.broadcast %1 : vector<1x512xf32> to vector<2x512xf32>
    %251 = arith.addf %249, %250 : vector<2x512xf32>
    %252 = vector.extract_strided_slice %251 {offsets = [0, 0], sizes = [2, 64], strides = [1, 1]} : vector<2x512xf32> to vector<2x64xf32>
    %253 = arith.negf %252 : vector<2x64xf32>
    %254 = math.exp %253 : vector<2x64xf32>
    %cst_45 = arith.constant 1.000000e+00 : f32
    %255 = vector.broadcast %cst_45 : f32 to vector<2x64xf32>
    %256 = arith.addf %255, %254 : vector<2x64xf32>
    %257 = arith.divf %255, %256 : vector<2x64xf32>
    %258 = vector.extract_strided_slice %251 {offsets = [0, 128], sizes = [2, 64], strides = [1, 1]} : vector<2x512xf32> to vector<2x64xf32>
    %259 = arith.negf %258 : vector<2x64xf32>
    %260 = math.exp %259 : vector<2x64xf32>
    %cst_46 = arith.constant 1.000000e+00 : f32
    %261 = vector.broadcast %cst_46 : f32 to vector<2x64xf32>
    %262 = arith.addf %261, %260 : vector<2x64xf32>
    %263 = arith.divf %261, %262 : vector<2x64xf32>
    %264 = vector.extract_strided_slice %251 {offsets = [0, 256], sizes = [2, 64], strides = [1, 1]} : vector<2x512xf32> to vector<2x64xf32>
    %265 = math.tanh %264 : vector<2x64xf32>
    %266 = vector.extract_strided_slice %251 {offsets = [0, 384], sizes = [2, 64], strides = [1, 1]} : vector<2x512xf32> to vector<2x64xf32>
    %267 = arith.negf %266 : vector<2x64xf32>
    %268 = math.exp %267 : vector<2x64xf32>
    %cst_47 = arith.constant 1.000000e+00 : f32
    %269 = vector.broadcast %cst_47 : f32 to vector<2x64xf32>
    %270 = arith.addf %269, %268 : vector<2x64xf32>
    %271 = arith.divf %269, %270 : vector<2x64xf32>
    %272 = arith.mulf %263, %244 : vector<2x64xf32>
    %273 = arith.mulf %257, %265 : vector<2x64xf32>
    %274 = arith.addf %272, %273 : vector<2x64xf32>
    %275 = math.tanh %274 : vector<2x64xf32>
    %276 = arith.mulf %271, %275 : vector<2x64xf32>
    %277 = vector.broadcast %c6_i32 : i32 to vector<2x1xi32>
    %278 = arith.cmpi slt, %277, %2 : vector<2x1xi32>
    %279 = vector.shape_cast %278 : vector<2x1xi1> to vector<2x1xi1>
    %280 = vector.broadcast %279 : vector<2x1xi1> to vector<2x64xi1>
    %281 = arith.select %280, %276, %241 : vector<2x64xi1>, vector<2x64xf32>
    %282 = vector.shape_cast %278 : vector<2x1xi1> to vector<2x1xi1>
    %283 = vector.broadcast %282 : vector<2x1xi1> to vector<2x64xi1>
    %284 = arith.select %283, %274, %244 : vector<2x64xi1>, vector<2x64xf32>
    %c7_i32 = arith.constant 7 : i32
    %285 = arith.index_cast %c7_i32 : i32 to index
    %c0_48 = arith.constant 0 : index
    %c0_49 = arith.constant 0 : index
    %286 = vector.load %arg0[%285, %c0_48, %c0_49] : memref<8x2x512xf32, #tpu.memory_space<vmem>>, vector<1x2x512xf32>
    %287 = vector.shape_cast %286 : vector<1x2x512xf32> to vector<2x512xf32>
    %cst_50 = arith.constant dense<0.000000e+00> : vector<2x512xf32>
    %288 = tpu.matmul %281, %0, %cst_50 {dimension_numbers = #tpu.dot_dimension_numbers<[1], [0], [0], [1], [0, 0, 1, 1], [], []>} : vector<2x64xf32>, vector<64x512xf32>, vector<2x512xf32> -> vector<2x512xf32>
    %289 = arith.addf %287, %288 : vector<2x512xf32>
    %290 = vector.broadcast %1 : vector<1x512xf32> to vector<2x512xf32>
    %291 = arith.addf %289, %290 : vector<2x512xf32>
    %292 = vector.extract_strided_slice %291 {offsets = [0, 0], sizes = [2, 64], strides = [1, 1]} : vector<2x512xf32> to vector<2x64xf32>
    %293 = arith.negf %292 : vector<2x64xf32>
    %294 = math.exp %293 : vector<2x64xf32>
    %cst_51 = arith.constant 1.000000e+00 : f32
    %295 = vector.broadcast %cst_51 : f32 to vector<2x64xf32>
    %296 = arith.addf %295, %294 : vector<2x64xf32>
    %297 = arith.divf %295, %296 : vector<2x64xf32>
    %298 = vector.extract_strided_slice %291 {offsets = [0, 128], sizes = [2, 64], strides = [1, 1]} : vector<2x512xf32> to vector<2x64xf32>
    %299 = arith.negf %298 : vector<2x64xf32>
    %300 = math.exp %299 : vector<2x64xf32>
    %cst_52 = arith.constant 1.000000e+00 : f32
    %301 = vector.broadcast %cst_52 : f32 to vector<2x64xf32>
    %302 = arith.addf %301, %300 : vector<2x64xf32>
    %303 = arith.divf %301, %302 : vector<2x64xf32>
    %304 = vector.extract_strided_slice %291 {offsets = [0, 256], sizes = [2, 64], strides = [1, 1]} : vector<2x512xf32> to vector<2x64xf32>
    %305 = math.tanh %304 : vector<2x64xf32>
    %306 = vector.extract_strided_slice %291 {offsets = [0, 384], sizes = [2, 64], strides = [1, 1]} : vector<2x512xf32> to vector<2x64xf32>
    %307 = arith.negf %306 : vector<2x64xf32>
    %308 = math.exp %307 : vector<2x64xf32>
    %cst_53 = arith.constant 1.000000e+00 : f32
    %309 = vector.broadcast %cst_53 : f32 to vector<2x64xf32>
    %310 = arith.addf %309, %308 : vector<2x64xf32>
    %311 = arith.divf %309, %310 : vector<2x64xf32>
    %312 = arith.mulf %303, %284 : vector<2x64xf32>
    %313 = arith.mulf %297, %305 : vector<2x64xf32>
    %314 = arith.addf %312, %313 : vector<2x64xf32>
    %315 = math.tanh %314 : vector<2x64xf32>
    %316 = arith.mulf %311, %315 : vector<2x64xf32>
    %317 = vector.broadcast %c7_i32 : i32 to vector<2x1xi32>
    %318 = arith.cmpi slt, %317, %2 : vector<2x1xi32>
    %319 = vector.shape_cast %318 : vector<2x1xi1> to vector<2x1xi1>
    %320 = vector.broadcast %319 : vector<2x1xi1> to vector<2x64xi1>
    %321 = arith.select %320, %316, %281 : vector<2x64xi1>, vector<2x64xf32>
    %322 = vector.shape_cast %318 : vector<2x1xi1> to vector<2x1xi1>
    %323 = vector.broadcast %322 : vector<2x1xi1> to vector<2x64xi1>
    %324 = arith.select %323, %314, %284 : vector<2x64xi1>, vector<2x64xf32>
    %c8_i32 = arith.constant 8 : i32
    %c0_54 = arith.constant 0 : index
    %c0_55 = arith.constant 0 : index
    %325 = vector.load %arg4[%c0_54, %c0_55] : memref<2x64xf32, #tpu.memory_space<vmem>>, vector<2x64xf32>
    tpu.vector_store %arg4[%c0_54, %c0_55], %321 {strides = array<i32>} : memref<2x64xf32, #tpu.memory_space<vmem>>, vector<2x64xf32>,
    return
  }
}

</mosaic_0001>

<llo_original>
// kernel: tpu_custom_call.1
$region0: #{tpu_custom_call.1}
  #allocation0 [shape = 'u32[]', space=smem, size = 0x4, offset = 0x4, fixed_abs, tag = 'smem constant byte address 0x4 - core index']
  #allocation1 [shape = 'u32[72,128]{1,0:T(1,128)}', space=vmem, size = 0x9000, scoped, tag = 'internal scratch']
  %s0 = inlined_call_operand.hbm [shape: f32[8,2,512], index: 0, kind: input, shape index: {}]
  %s1 = inlined_call_operand.vmem [shape: s32[2,1], index: 1, kind: input, shape index: {}]
  %s2 = inlined_call_operand.hbm [shape: f32[64,512], index: 2, kind: input, shape index: {}]
  %s3 = inlined_call_operand.vmem [shape: f32[1,512], index: 3, kind: input, shape index: {}]
  %s4 = inlined_call_operand.hbm [shape: f32[2,64], index: 4, kind: output, shape index: {}]
  %s5 = sld [smem:[#allocation0]]
  $region34: #{tpu_custom_call.1} parent=0
    _
  %s7 = ssub.s32 1, %s5
  %s8 = scalar_select 0, %s7, %s5
  $region1: #{tpu_custom_call.1} parent=0
    #allocation2 [shape = 'u8[32768]{0}', space=vmem, size = 0x8000, scoped, tag = 'input window, operand 0, single buffered']
    #allocation3 [shape = 's32[1]{0}', space=sflag, size = 0x4, scoped, tag = 'scoped memory for tpu_custom_call.1']
    #allocation4 [shape = 's32[1]{0}', space=sflag, size = 0x4, scoped, tag = 'scoped memory for tpu_custom_call.1']
    #allocation5 [shape = 'u8[131072]{0}', space=vmem, size = 0x20000, scoped, tag = 'input window, operand 2, single buffered']
    #allocation6 [shape = 's32[1]{0}', space=sflag, size = 0x4, scoped, tag = 'scoped memory for tpu_custom_call.1']
    #allocation7 [shape = 'u8[1024]{0}', space=vmem, size = 0x400, scoped, tag = 'output window, operand 0, single buffered']
    %9 = vsyncpa [#allocation3], 0
    %10 = vsyncpa [#allocation6], 0
    %11 = vsyncpa [#allocation4], 0
    // Predicated region
    $region2: #{tpu_custom_call.1} parent=1 // pred_check
      _
    $region3: #{tpu_custom_call.1} parent=1 // pred_check_branch
      %13 = sbr.rel (0) target = $region5
    $region4: #{tpu_custom_call.1} parent=1 // pred_region
      %15 = vsyncadd [#allocation3], 0
      %s16 = sshll.u32 %s0, 4
      %s17 = int_to_ptr.hbm [resolvable:$true] %s16
      %s18 = sshll.u32 [#allocation2], 4
      %s19 = int_to_ptr.vmem [resolvable:$true] %s18
      %24 = dma.hbm_to_vmem [thread:$0]  %s17, 1024, %s19, [#allocation3], 128, 128, 8
    $region5: #{tpu_custom_call.1} parent=1 // pred_fallthru
      _
    // Predicated region
    $region6: #{tpu_custom_call.1} parent=1 // pred_check
      _
    $region7: #{tpu_custom_call.1} parent=1 // pred_check_branch
      %26 = sbr.rel (0) target = $region9
    $region8: #{tpu_custom_call.1} parent=1 // pred_region
      _
    $region9: #{tpu_custom_call.1} parent=1 // pred_fallthru
      _
    // Predicated region
    $region10: #{tpu_custom_call.1} parent=1 // pred_check
      _
    $region11: #{tpu_custom_call.1} parent=1 // pred_check_branch
      %28 = sbr.rel (0) target = $region13
    $region12: #{tpu_custom_call.1} parent=1 // pred_region
      %30 = vsyncadd [#allocation6], 0
      %s31 = sshll.u32 %s2, 4
      %s32 = int_to_ptr.hbm [resolvable:$true] %s31
      %s33 = sshll.u32 [#allocation5], 4
      %s34 = int_to_ptr.vmem [resolvable:$true] %s33
      %39 = dma.hbm_to_vmem [thread:$0]  %s32, 4096, %s34, [#allocation6], 512, 512, 32
    $region13: #{tpu_custom_call.1} parent=1 // pred_fallthru
      _
    // Predicated region
    $region14: #{tpu_custom_call.1} parent=1 // pred_check
      _
    $region15: #{tpu_custom_call.1} parent=1 // pred_check_branch
      %41 = sbr.rel (0) target = $region17
    $region16: #{tpu_custom_call.1} parent=1 // pred_region
      _
    $region17: #{tpu_custom_call.1} parent=1 // pred_fallthru
      _
    // Predicated region
    $region18: #{tpu_custom_call.1} parent=1 // pred_check
      _
    $region19: #{tpu_custom_call.1} parent=1 // pred_check_branch
      %43 = sbr.rel (0) target = $region21
    $region20: #{tpu_custom_call.1} parent=1 // pred_region
      %45 = dma.done [#allocation3], 1024
    $region21: #{tpu_custom_call.1} parent=1 // pred_fallthru
      _
    // Predicated region
    $region22: #{tpu_custom_call.1} parent=1 // pred_check
      _
    $region23: #{tpu_custom_call.1} parent=1 // pred_check_branch
      %47 = sbr.rel (0) target = $region25
    $region24: #{tpu_custom_call.1} parent=1 // pred_region
      %49 = dma.done [#allocation6], 4096
    $region25: #{tpu_custom_call.1} parent=1 // pred_fallthru
      _
    %v50 = vld [vmem:[#allocation5] sm:$0xff]
    %v51 = vld [vmem:[#allocation5 + $0x8] sm:$0xff]
    %v52 = vld [vmem:[#allocation5 + $0x10] sm:$0xff]
    %v53 = vld [vmem:[#allocation5 + $0x18] sm:$0xff]
    %v54 = vld [vmem:[#allocation5 + $0x20] sm:$0xff]
    %v55 = vld [vmem:[#allocation5 + $0x28] sm:$0xff]
    %v56 = vld [vmem:[#allocation5 + $0x30] sm:$0xff]
    %v57 = vld [vmem:[#allocation5 + $0x38] sm:$0xff]
    %v58 = vld [vmem:[#allocation5 + $0x40] sm:$0xff]
    %v59 = vld [vmem:[#allocation5 + $0x48] sm:$0xff]
    %v60 = vld [vmem:[#allocation5 + $0x50] sm:$0xff]
    %v61 = vld [vmem:[#allocation5 + $0x58] sm:$0xff]
    %v62 = vld [vmem:[#allocation5 + $0x60] sm:$0xff]
    %v63 = vld [vmem:[#allocation5 + $0x68] sm:$0xff]
    %v64 = vld [vmem:[#allocation5 + $0x70] sm:$0xff]
    %v65 = vld [vmem:[#allocation5 + $0x78] sm:$0xff]
    %v66 = vld [vmem:[#allocation5 + $0x80] sm:$0xff]
    %v67 = vld [vmem:[#allocation5 + $0x88] sm:$0xff]
    %v68 = vld [vmem:[#allocation5 + $0x90] sm:$0xff]
    %v69 = vld [vmem:[#allocation5 + $0x98] sm:$0xff]
    %v70 = vld [vmem:[#allocation5 + $0xa0] sm:$0xff]
    %v71 = vld [vmem:[#allocation5 + $0xa8] sm:$0xff]
    %v72 = vld [vmem:[#allocation5 + $0xb0] sm:$0xff]
    %v73 = vld [vmem:[#allocation5 + $0xb8] sm:$0xff]
    %v74 = vld [vmem:[#allocation5 + $0xc0] sm:$0xff]
    %v75 = vld [vmem:[#allocation5 + $0xc8] sm:$0xff]
    %v76 = vld [vmem:[#allocation5 + $0xd0] sm:$0xff]
    %v77 = vld [vmem:[#allocation5 + $0xd8] sm:$0xff]
    %v78 = vld [vmem:[#allocation5 + $0xe0] sm:$0xff]
    %v79 = vld [vmem:[#allocation5 + $0xe8] sm:$0xff]
    %v80 = vld [vmem:[#allocation5 + $0xf0] sm:$0xff]
    %v81 = vld [vmem:[#allocation5 + $0xf8] sm:$0xff]
    %v82 = vld [vmem:[%s3] sm:$0xf]
    %v83 = vld [vmem:[%s1] sm:$0x3]
    %v84 = vld [vmem:[#allocation2] sm:$0xff]
    %vm85 = vcmask 523264
    %v87 = vsel %vm85, 0.0, 0
    %89 = vmatpush.msra.mxu0 0.0
    %90 = vmatpush.msra.mxu0 0.0
    %91 = vmatpush.msra.mxu0 0.0
    %92 = vmatpush.msra.mxu0 0.0
    %93 = vmatpush.msra.mxu0 0.0
    %94 = vmatpush.msra.mxu0 0.0
    %95 = vmatpush.msra.mxu0 0.0
    %96 = vmatpush.msra.mxu0 0.0
    %97 = vmatpush.msra.mxu0 %v78
    %98 = vmatpush.msra.mxu0 %v74
    %99 = vmatpush.msra.mxu0 %v70
    %100 = vmatpush.msra.mxu0 %v66
    %101 = vmatpush.msra.mxu0 %v62
    %102 = vmatpush.msra.mxu0 %v58
    %103 = vmatpush.msra.mxu0 %v54
    %104 = vmatpush.msra.mxu0 %v50
    %105 = vmatmul.f32.gmra.mxu0 %v87
    %v106 = vpop.f32.mrf.mxu0
    %v107 = vadd.f32 0.0, %v106
    %108 = vdwg.mxu0
    %109 = vmatpush.msra.mxu0 0.0
    %110 = vmatpush.msra.mxu0 0.0
    %111 = vmatpush.msra.mxu0 0.0
    %112 = vmatpush.msra.mxu0 0.0
    %113 = vmatpush.msra.mxu0 0.0
    %114 = vmatpush.msra.mxu0 0.0
    %115 = vmatpush.msra.mxu0 0.0
    %116 = vmatpush.msra.mxu0 0.0
    %117 = vmatpush.msra.mxu0 %v79
    %118 = vmatpush.msra.mxu0 %v75
    %119 = vmatpush.msra.mxu0 %v71
    %120 = vmatpush.msra.mxu0 %v67
    %121 = vmatpush.msra.mxu0 %v63
    %122 = vmatpush.msra.mxu0 %v59
    %123 = vmatpush.msra.mxu0 %v55
    %124 = vmatpush.msra.mxu0 %v51
    %125 = vmatmul.f32.gmra.mxu0 %v87
    %v126 = vpop.f32.mrf.mxu0
    %v127 = vadd.f32 0.0, %v126
    %128 = vdwg.mxu0
    %129 = vmatpush.msra.mxu0 0.0
    %130 = vmatpush.msra.mxu0 0.0
    %131 = vmatpush.msra.mxu0 0.0
    %132 = vmatpush.msra.mxu0 0.0
    %133 = vmatpush.msra.mxu0 0.0
    %134 = vmatpush.msra.mxu0 0.0
    %135 = vmatpush.msra.mxu0 0.0
    %136 = vmatpush.msra.mxu0 0.0
    %137 = vmatpush.msra.mxu0 %v80
    %138 = vmatpush.msra.mxu0 %v76
    %139 = vmatpush.msra.mxu0 %v72
    %140 = vmatpush.msra.mxu0 %v68
    %141 = vmatpush.msra.mxu0 %v64
    %142 = vmatpush.msra.mxu0 %v60
    %143 = vmatpush.msra.mxu0 %v56
    %144 = vmatpush.msra.mxu0 %v52
    %145 = vmatmul.f32.gmra.mxu0 %v87
    %v146 = vpop.f32.mrf.mxu0
    %v147 = vadd.f32 0.0, %v146
    %148 = vdwg.mxu0
    %149 = vmatpush.msra.mxu0 0.0
    %150 = vmatpush.msra.mxu0 0.0
    %151 = vmatpush.msra.mxu0 0.0
    %152 = vmatpush.msra.mxu0 0.0
    %153 = vmatpush.msra.mxu0 0.0
    %154 = vmatpush.msra.mxu0 0.0
    %155 = vmatpush.msra.mxu0 0.0
    %156 = vmatpush.msra.mxu0 0.0
    %157 = vmatpush.msra.mxu0 %v81
    %158 = vmatpush.msra.mxu0 %v77
    %159 = vmatpush.msra.mxu0 %v73
    %160 = vmatpush.msra.mxu0 %v69
    %161 = vmatpush.msra.mxu0 %v65
    %162 = vmatpush.msra.mxu0 %v61
    %163 = vmatpush.msra.mxu0 %v57
    %164 = vmatpush.msra.mxu0 %v53
    %165 = vmatmul.f32.gmra.mxu0 %v87
    %v166 = vpop.f32.mrf.mxu0
    %v167 = vadd.f32 0.0, %v166
    %168 = vdwg.mxu0
    %v173 = vrot.slane %v127, 6
    %v174 = vrot.slane %v147, 4
    %v175 = vrot.slane %v167, 2
    %vm176 = vcmask 1041408
    %v177 = vsel %vm176, %v107, %v173
    %vm178 = vcmask 1045508
    %v179 = vsel %vm178, %v174, %v175
    %vm180 = vcmask 1043456
    %v181 = vsel %vm180, %v177, %v179
    %v183 = vadd.f32 %v84, %v181
    %v185 = vperm.slane %v82, 0
    %v186 = vperm.slane %v82, 1
    %v187 = vperm.slane %v82, 2
    %v188 = vperm.slane %v82, 3
    %v189 = vrot.slane %v186, 6
    %v190 = vrot.slane %v187, 4
    %v191 = vrot.slane %v188, 2
    %v192 = vsel %vm176, %v185, %v189
    %v193 = vsel %vm178, %v190, %v191
    %v194 = vsel %vm180, %v192, %v193
    %v196 = vadd.f32 %v183, %v194
    %v197 = vxor.u32 %v196, 2147483648
    %v198 = vmul.f32 %v197, 1.442695
    %v199 = vpow.pop %v198
    %v200 = vadd.f32 %v199, 1.0
    %v201 = vrcp.pop %v200
    %v202 = vmul.f32 %v200, %v201
    %v203 = vsub.f32 1.0, %v202
    %v204 = vmul.f32 %v201, %v203
    %v205 = vadd.f32 %v201, %v204
    %vm206 = vweird.f32 %v200
    %vm207 = vweird.f32 %v201
    %vm208 = vmor %vm206, %vm207
    %v209 = vsel %vm208, %v201, %v205
    %v210 = vand.u32 2147483647, %v200
    %vm211 = vcmp.eq.f32.partialorder %v210, 8.507059e+37
    %v212 = vand.u32 %v200, 2147483648
    %v213 = vor.u32 1.1754944e-38, %v212
    %v214 = vsel %vm211, %v213, %v209
    %v215 = vmul.f32 1.0, %v214
    %v217 = vrot.slane %v196, 2
    %v219 = vxor.u32 %v217, 2147483648
    %v220 = vmul.f32 %v219, 1.442695
    %v221 = vpow.pop %v220
    %v222 = vadd.f32 %v221, 1.0
    %v223 = vrcp.pop %v222
    %v224 = vmul.f32 %v222, %v223
    %v225 = vsub.f32 1.0, %v224
    %v226 = vmul.f32 %v223, %v225
    %v227 = vadd.f32 %v223, %v226
    %vm228 = vweird.f32 %v222
    %vm229 = vweird.f32 %v223
    %vm230 = vmor %vm228, %vm229
    %v231 = vsel %vm230, %v223, %v227
    %v232 = vand.u32 2147483647, %v222
    %vm233 = vcmp.eq.f32.partialorder %v232, 8.507059e+37
    %v234 = vand.u32 %v222, 2147483648
    %v235 = vor.u32 1.1754944e-38, %v234
    %v236 = vsel %vm233, %v235, %v231
    %v237 = vmul.f32 1.0, %v236
    %v238 = vrot.slane %v196, 4
    %v240 = vtanh.pop %v238
    %v241 = vrot.slane %v196, 6
    %v243 = vxor.u32 %v241, 2147483648
    %v244 = vmul.f32 %v243, 1.442695
    %v245 = vpow.pop %v244
    %v246 = vadd.f32 %v245, 1.0
    %v247 = vrcp.pop %v246
    %v248 = vmul.f32 %v246, %v247
    %v249 = vsub.f32 1.0, %v248
    %v250 = vmul.f32 %v247, %v249
    %v251 = vadd.f32 %v247, %v250
    %vm252 = vweird.f32 %v246
    %vm253 = vweird.f32 %v247
    %vm254 = vmor %vm252, %vm253
    %v255 = vsel %vm254, %v247, %v251
    %v256 = vand.u32 2147483647, %v246
    %vm257 = vcmp.eq.f32.partialorder %v256, 8.507059e+37
    %v258 = vand.u32 %v246, 2147483648
    %v259 = vor.u32 1.1754944e-38, %v258
    %v260 = vsel %vm257, %v259, %v255
    %v261 = vmul.f32 1.0, %v260
    %v262 = vmul.f32 %v237, 0.0
    %v263 = vmul.f32 %v215, %v240
    %v264 = vadd.f32 %v262, %v263
    %v265 = vtanh.pop %v264
    %v266 = vmul.f32 %v261, %v265
    %vm267 = vcmp.gt.s32.totalorder %v83, 0
    %v268 = vsel %vm267, 1, 0
    %269 = vset.pattern.permute.xlu0 0
    %270 = vperm.xlu0 %269, %v268
    %v271 = vpop.permute.xlu0 %270
    %vm272 = vcmp.eq.s32.totalorder %v271, 1
    %v273 = vsel %vm272, %v266, 0.0
    %v274 = vsel %vm272, %v264, 0.0
    %s275 = scalar_lea.vmem [#allocation2], 8
    %v276 = vld [vmem:[%s275] sm:$0xff]
    %v278 = vsel %vm85, %v273, 0
    %280 = vmatpush.msra.mxu0 0.0
    %281 = vmatpush.msra.mxu0 0.0
    %282 = vmatpush.msra.mxu0 0.0
    %283 = vmatpush.msra.mxu0 0.0
    %284 = vmatpush.msra.mxu0 0.0
    %285 = vmatpush.msra.mxu0 0.0
    %286 = vmatpush.msra.mxu0 0.0
    %287 = vmatpush.msra.mxu0 0.0
    %288 = vmatpush.msra.mxu0 %v78
    %289 = vmatpush.msra.mxu0 %v74
    %290 = vmatpush.msra.mxu0 %v70
    %291 = vmatpush.msra.mxu0 %v66
    %292 = vmatpush.msra.mxu0 %v62
    %293 = vmatpush.msra.mxu0 %v58
    %294 = vmatpush.msra.mxu0 %v54
    %295 = vmatpush.msra.mxu0 %v50
    %296 = vmatmul.f32.gmra.mxu0 %v278
    %v297 = vpop.f32.mrf.mxu0
    %v298 = vadd.f32 0.0, %v297
    %299 = vdwg.mxu0
    %300 = vmatpush.msra.mxu0 0.0
    %301 = vmatpush.msra.mxu0 0.0
    %302 = vmatpush.msra.mxu0 0.0
    %303 = vmatpush.msra.mxu0 0.0
    %304 = vmatpush.msra.mxu0 0.0
    %305 = vmatpush.msra.mxu0 0.0
    %306 = vmatpush.msra.mxu0 0.0
    %307 = vmatpush.msra.mxu0 0.0
    %308 = vmatpush.msra.mxu0 %v79
    %309 = vmatpush.msra.mxu0 %v75
    %310 = vmatpush.msra.mxu0 %v71
    %311 = vmatpush.msra.mxu0 %v67
    %312 = vmatpush.msra.mxu0 %v63
    %313 = vmatpush.msra.mxu0 %v59
    %314 = vmatpush.msra.mxu0 %v55
    %315 = vmatpush.msra.mxu0 %v51
    %316 = vmatmul.f32.gmra.mxu0 %v278
    %v317 = vpop.f32.mrf.mxu0
    %v318 = vadd.f32 0.0, %v317
    %319 = vdwg.mxu0
    %320 = vmatpush.msra.mxu0 0.0
    %321 = vmatpush.msra.mxu0 0.0
    %322 = vmatpush.msra.mxu0 0.0
    %323 = vmatpush.msra.mxu0 0.0
    %324 = vmatpush.msra.mxu0 0.0
    %325 = vmatpush.msra.mxu0 0.0
    %326 = vmatpush.msra.mxu0 0.0
    %327 = vmatpush.msra.mxu0 0.0
    %328 = vmatpush.msra.mxu0 %v80
    %329 = vmatpush.msra.mxu0 %v76
    %330 = vmatpush.msra.mxu0 %v72
    %331 = vmatpush.msra.mxu0 %v68
    %332 = vmatpush.msra.mxu0 %v64
    %333 = vmatpush.msra.mxu0 %v60
    %334 = vmatpush.msra.mxu0 %v56
    %335 = vmatpush.msra.mxu0 %v52
    %336 = vmatmul.f32.gmra.mxu0 %v278
    %v337 = vpop.f32.mrf.mxu0
    %v338 = vadd.f32 0.0, %v337
    %339 = vdwg.mxu0
    %340 = vmatpush.msra.mxu0 0.0
    %341 = vmatpush.msra.mxu0 0.0
    %342 = vmatpush.msra.mxu0 0.0
    %343 = vmatpush.msra.mxu0 0.0
    %344 = vmatpush.msra.mxu0 0.0
    %345 = vmatpush.msra.mxu0 0.0
    %346 = vmatpush.msra.mxu0 0.0
    %347 = vmatpush.msra.mxu0 0.0
    %348 = vmatpush.msra.mxu0 %v81
    %349 = vmatpush.msra.mxu0 %v77
    %350 = vmatpush.msra.mxu0 %v73
    %351 = vmatpush.msra.mxu0 %v69
    %352 = vmatpush.msra.mxu0 %v65
    %353 = vmatpush.msra.mxu0 %v61
    %354 = vmatpush.msra.mxu0 %v57
    %355 = vmatpush.msra.mxu0 %v53
    %356 = vmatmul.f32.gmra.mxu0 %v278
    %v357 = vpop.f32.mrf.mxu0
    %v358 = vadd.f32 0.0, %v357
    %359 = vdwg.mxu0
    %v364 = vrot.slane %v318, 6
    %v365 = vrot.slane %v338, 4
    %v366 = vrot.slane %v358, 2
    %v367 = vsel %vm176, %v298, %v364
    %v368 = vsel %vm178, %v365, %v366
    %v369 = vsel %vm180, %v367, %v368
    %v371 = vadd.f32 %v276, %v369
    %v372 = vadd.f32 %v371, %v194
    %v373 = vxor.u32 %v372, 2147483648
    %v374 = vmul.f32 %v373, 1.442695
    %v375 = vpow.pop %v374
    %v376 = vadd.f32 %v375, 1.0
    %v377 = vrcp.pop %v376
    %v378 = vmul.f32 %v376, %v377
    %v379 = vsub.f32 1.0, %v378
    %v380 = vmul.f32 %v377, %v379
    %v381 = vadd.f32 %v377, %v380
    %vm382 = vweird.f32 %v376
    %vm383 = vweird.f32 %v377
    %vm384 = vmor %vm382, %vm383
    %v385 = vsel %vm384, %v377, %v381
    %v386 = vand.u32 2147483647, %v376
    %vm387 = vcmp.eq.f32.partialorder %v386, 8.507059e+37
    %v388 = vand.u32 %v376, 2147483648
    %v389 = vor.u32 1.1754944e-38, %v388
    %v390 = vsel %vm387, %v389, %v385
    %v391 = vmul.f32 1.0, %v390
    %v393 = vrot.slane %v372, 2
    %v395 = vxor.u32 %v393, 2147483648
    %v396 = vmul.f32 %v395, 1.442695
    %v397 = vpow.pop %v396
    %v398 = vadd.f32 %v397, 1.0
    %v399 = vrcp.pop %v398
    %v400 = vmul.f32 %v398, %v399
    %v401 = vsub.f32 1.0, %v400
    %v402 = vmul.f32 %v399, %v401
    %v403 = vadd.f32 %v399, %v402
    %vm404 = vweird.f32 %v398
    %vm405 = vweird.f32 %v399
    %vm406 = vmor %vm404, %vm405
    %v407 = vsel %vm406, %v399, %v403
    %v408 = vand.u32 2147483647, %v398
    %vm409 = vcmp.eq.f32.partialorder %v408, 8.507059e+37
    %v410 = vand.u32 %v398, 2147483648
    %v411 = vor.u32 1.1754944e-38, %v410
    %v412 = vsel %vm409, %v411, %v407
    %v413 = vmul.f32 1.0, %v412
    %v414 = vrot.slane %v372, 4
    %v416 = vtanh.pop %v414
    %v417 = vrot.slane %v372, 6
    %v419 = vxor.u32 %v417, 2147483648
    %v420 = vmul.f32 %v419, 1.442695
    %v421 = vpow.pop %v420
    %v422 = vadd.f32 %v421, 1.0
    %v423 = vrcp.pop %v422
    %v424 = vmul.f32 %v422, %v423
    %v425 = vsub.f32 1.0, %v424
    %v426 = vmul.f32 %v423, %v425
    %v427 = vadd.f32 %v423, %v426
    %vm428 = vweird.f32 %v422
    %vm429 = vweird.f32 %v423
    %vm430 = vmor %vm428, %vm429
    %v431 = vsel %vm430, %v423, %v427
    %v432 = vand.u32 2147483647, %v422
    %vm433 = vcmp.eq.f32.partialorder %v432, 8.507059e+37
    %v434 = vand.u32 %v422, 2147483648
    %v435 = vor.u32 1.1754944e-38, %v434
    %v436 = vsel %vm433, %v435, %v431
    %v437 = vmul.f32 1.0, %v436
    %v438 = vmul.f32 %v413, %v274
    %v439 = vmul.f32 %v391, %v416
    %v440 = vadd.f32 %v438, %v439
    %v441 = vtanh.pop %v440
    %v442 = vmul.f32 %v437, %v441
    %vm443 = vcmp.gt.s32.totalorder %v83, 1
    %v444 = vsel %vm443, 1, 0
    %445 = vset.pattern.permute.xlu0 0
    %446 = vperm.xlu0 %445, %v444
    %v447 = vpop.permute.xlu0 %446
    %vm448 = vcmp.eq.s32.totalorder %v447, 1
    %v449 = vsel %vm448, %v442, %v273
    %v450 = vsel %vm448, %v440, %v274
    %s451 = scalar_lea.vmem [#allocation2], 16
    %v452 = vld [vmem:[%s451] sm:$0xff]
    %v454 = vsel %vm85, %v449, 0
    %456 = vmatpush.msra.mxu0 0.0
    %457 = vmatpush.msra.mxu0 0.0
    %458 = vmatpush.msra.mxu0 0.0
    %459 = vmatpush.msra.mxu0 0.0
    %460 = vmatpush.msra.mxu0 0.0
    %461 = vmatpush.msra.mxu0 0.0
    %462 = vmatpush.msra.mxu0 0.0
    %463 = vmatpush.msra.mxu0 0.0
    %464 = vmatpush.msra.mxu0 %v78
    %465 = vmatpush.msra.mxu0 %v74
    %466 = vmatpush.msra.mxu0 %v70
    %467 = vmatpush.msra.mxu0 %v66
    %468 = vmatpush.msra.mxu0 %v62
    %469 = vmatpush.msra.mxu0 %v58
    %470 = vmatpush.msra.mxu0 %v54
    %471 = vmatpush.msra.mxu0 %v50
    %472 = vmatmul.f32.gmra.mxu0 %v454
    %v473 = vpop.f32.mrf.mxu0
    %v474 = vadd.f32 0.0, %v473
    %475 = vdwg.mxu0
    %476 = vmatpush.msra.mxu0 0.0
    %477 = vmatpush.msra.mxu0 0.0
    %478 = vmatpush.msra.mxu0 0.0
    %479 = vmatpush.msra.mxu0 0.0
    %480 = vmatpush.msra.mxu0 0.0
    %481 = vmatpush.msra.mxu0 0.0
    %482 = vmatpush.msra.mxu0 0.0
    %483 = vmatpush.msra.mxu0 0.0
    %484 = vmatpush.msra.mxu0 %v79
    %485 = vmatpush.msra.mxu0 %v75
    %486 = vmatpush.msra.mxu0 %v71
    %487 = vmatpush.msra.mxu0 %v67
    %488 = vmatpush.msra.mxu0 %v63
    %489 = vmatpush.msra.mxu0 %v59
    %490 = vmatpush.msra.mxu0 %v55
    %491 = vmatpush.msra.mxu0 %v51
    %492 = vmatmul.f32.gmra.mxu0 %v454
    %v493 = vpop.f32.mrf.mxu0
    %v494 = vadd.f32 0.0, %v493
    %495 = vdwg.mxu0
    %496 = vmatpush.msra.mxu0 0.0
    %497 = vmatpush.msra.mxu0 0.0
    %498 = vmatpush.msra.mxu0 0.0
    %499 = vmatpush.msra.mxu0 0.0
    %500 = vmatpush.msra.mxu0 0.0
    %501 = vmatpush.msra.mxu0 0.0
    %502 = vmatpush.msra.mxu0 0.0
    %503 = vmatpush.msra.mxu0 0.0
    %504 = vmatpush.msra.mxu0 %v80
    %505 = vmatpush.msra.mxu0 %v76
    %506 = vmatpush.msra.mxu0 %v72
    %507 = vmatpush.msra.mxu0 %v68
    %508 = vmatpush.msra.mxu0 %v64
    %509 = vmatpush.msra.mxu0 %v60
    %510 = vmatpush.msra.mxu0 %v56
    %511 = vmatpush.msra.mxu0 %v52
    %512 = vmatmul.f32.gmra.mxu0 %v454
    %v513 = vpop.f32.mrf.mxu0
    %v514 = vadd.f32 0.0, %v513
    %515 = vdwg.mxu0
    %516 = vmatpush.msra.mxu0 0.0
    %517 = vmatpush.msra.mxu0 0.0
    %518 = vmatpush.msra.mxu0 0.0
    %519 = vmatpush.msra.mxu0 0.0
    %520 = vmatpush.msra.mxu0 0.0
    %521 = vmatpush.msra.mxu0 0.0
    %522 = vmatpush.msra.mxu0 0.0
    %523 = vmatpush.msra.mxu0 0.0
    %524 = vmatpush.msra.mxu0 %v81
    %525 = vmatpush.msra.mxu0 %v77
    %526 = vmatpush.msra.mxu0 %v73
    %527 = vmatpush.msra.mxu0 %v69
    %528 = vmatpush.msra.mxu0 %v65
    %529 = vmatpush.msra.mxu0 %v61
    %530 = vmatpush.msra.mxu0 %v57
    %531 = vmatpush.msra.mxu0 %v53
    %532 = vmatmul.f32.gmra.mxu0 %v454
    %v533 = vpop.f32.mrf.mxu0
    %v534 = vadd.f32 0.0, %v533
    %535 = vdwg.mxu0
    %v540 = vrot.slane %v494, 6
    %v541 = vrot.slane %v514, 4
    %v542 = vrot.slane %v534, 2
    %v543 = vsel %vm176, %v474, %v540
    %v544 = vsel %vm178, %v541, %v542
    %v545 = vsel %vm180, %v543, %v544
    %v547 = vadd.f32 %v452, %v545
    %v548 = vadd.f32 %v547, %v194
    %v549 = vxor.u32 %v548, 2147483648
    %v550 = vmul.f32 %v549, 1.442695
    %v551 = vpow.pop %v550
    %v552 = vadd.f32 %v551, 1.0
    %v553 = vrcp.pop %v552
    %v554 = vmul.f32 %v552, %v553
    %v555 = vsub.f32 1.0, %v554
    %v556 = vmul.f32 %v553, %v555
    %v557 = vadd.f32 %v553, %v556
    %vm558 = vweird.f32 %v552
    %vm559 = vweird.f32 %v553
    %vm560 = vmor %vm558, %vm559
    %v561 = vsel %vm560, %v553, %v557
    %v562 = vand.u32 2147483647, %v552
    %vm563 = vcmp.eq.f32.partialorder %v562, 8.507059e+37
    %v564 = vand.u32 %v552, 2147483648
    %v565 = vor.u32 1.1754944e-38, %v564
    %v566 = vsel %vm563, %v565, %v561
    %v567 = vmul.f32 1.0, %v566
    %v569 = vrot.slane %v548, 2
    %v571 = vxor.u32 %v569, 2147483648
    %v572 = vmul.f32 %v571, 1.442695
    %v573 = vpow.pop %v572
    %v574 = vadd.f32 %v573, 1.0
    %v575 = vrcp.pop %v574
    %v576 = vmul.f32 %v574, %v575
    %v577 = vsub.f32 1.0, %v576
    %v578 = vmul.f32 %v575, %v577
    %v579 = vadd.f32 %v575, %v578
    %vm580 = vweird.f32 %v574
    %vm581 = vweird.f32 %v575
    %vm582 = vmor %vm580, %vm581
    %v583 = vsel %vm582, %v575, %v579
    %v584 = vand.u32 2147483647, %v574
    %vm585 = vcmp.eq.f32.partialorder %v584, 8.507059e+37
    %v586 = vand.u32 %v574, 2147483648
    %v587 = vor.u32 1.1754944e-38, %v586
    %v588 = vsel %vm585, %v587, %v583
    %v589 = vmul.f32 1.0, %v588
    %v590 = vrot.slane %v548, 4
    %v592 = vtanh.pop %v590
    %v593 = vrot.slane %v548, 6
    %v595 = vxor.u32 %v593, 2147483648
    %v596 = vmul.f32 %v595, 1.442695
    %v597 = vpow.pop %v596
    %v598 = vadd.f32 %v597, 1.0
    %v599 = vrcp.pop %v598
    %v600 = vmul.f32 %v598, %v599
    %v601 = vsub.f32 1.0, %v600
    %v602 = vmul.f32 %v599, %v601
    %v603 = vadd.f32 %v599, %v602
    %vm604 = vweird.f32 %v598
    %vm605 = vweird.f32 %v599
    %vm606 = vmor %vm604, %vm605
    %v607 = vsel %vm606, %v599, %v603
    %v608 = vand.u32 2147483647, %v598
    %vm609 = vcmp.eq.f32.partialorder %v608, 8.507059e+37
    %v610 = vand.u32 %v598, 2147483648
    %v611 = vor.u32 1.1754944e-38, %v610
    %v612 = vsel %vm609, %v611, %v607
    %v613 = vmul.f32 1.0, %v612
    %v614 = vmul.f32 %v589, %v450
    %v615 = vmul.f32 %v567, %v592
    %v616 = vadd.f32 %v614, %v615
    %v617 = vtanh.pop %v616
    %v618 = vmul.f32 %v613, %v617
    %vm619 = vcmp.gt.s32.totalorder %v83, 2
    %v620 = vsel %vm619, 1, 0
    %621 = vset.pattern.permute.xlu0 0
    %622 = vperm.xlu0 %621, %v620
    %v623 = vpop.permute.xlu0 %622
    %vm624 = vcmp.eq.s32.totalorder %v623, 1
    %v625 = vsel %vm624, %v618, %v449
    %v626 = vsel %vm624, %v616, %v450
    %s627 = scalar_lea.vmem [#allocation2], 24
    %v628 = vld [vmem:[%s627] sm:$0xff]
    %v630 = vsel %vm85, %v625, 0
    %632 = vmatpush.msra.mxu0 0.0
    %633 = vmatpush.msra.mxu0 0.0
    %634 = vmatpush.msra.mxu0 0.0
    %635 = vmatpush.msra.mxu0 0.0
    %636 = vmatpush.msra.mxu0 0.0
    %637 = vmatpush.msra.mxu0 0.0
    %638 = vmatpush.msra.mxu0 0.0
    %639 = vmatpush.msra.mxu0 0.0
    %640 = vmatpush.msra.mxu0 %v78
    %641 = vmatpush.msra.mxu0 %v74
    %642 = vmatpush.msra.mxu0 %v70
    %643 = vmatpush.msra.mxu0 %v66
    %644 = vmatpush.msra.mxu0 %v62
    %645 = vmatpush.msra.mxu0 %v58
    %646 = vmatpush.msra.mxu0 %v54
    %647 = vmatpush.msra.mxu0 %v50
    %648 = vmatmul.f32.gmra.mxu0 %v630
    %v649 = vpop.f32.mrf.mxu0
    %v650 = vadd.f32 0.0, %v649
    %651 = vdwg.mxu0
    %652 = vmatpush.msra.mxu0 0.0
    %653 = vmatpush.msra.mxu0 0.0
    %654 = vmatpush.msra.mxu0 0.0
    %655 = vmatpush.msra.mxu0 0.0
    %656 = vmatpush.msra.mxu0 0.0
    %657 = vmatpush.msra.mxu0 0.0
    %658 = vmatpush.msra.mxu0 0.0
    %659 = vmatpush.msra.mxu0 0.0
    %660 = vmatpush.msra.mxu0 %v79
    %661 = vmatpush.msra.mxu0 %v75
    %662 = vmatpush.msra.mxu0 %v71
    %663 = vmatpush.msra.mxu0 %v67
    %664 = vmatpush.msra.mxu0 %v63
    %665 = vmatpush.msra.mxu0 %v59
    %666 = vmatpush.msra.mxu0 %v55
    %667 = vmatpush.msra.mxu0 %v51
    %668 = vmatmul.f32.gmra.mxu0 %v630
    %v669 = vpop.f32.mrf.mxu0
    %v670 = vadd.f32 0.0, %v669
    %671 = vdwg.mxu0
    %672 = vmatpush.msra.mxu0 0.0
    %673 = vmatpush.msra.mxu0 0.0
    %674 = vmatpush.msra.mxu0 0.0
    %675 = vmatpush.msra.mxu0 0.0
    %676 = vmatpush.msra.mxu0 0.0
    %677 = vmatpush.msra.mxu0 0.0
    %678 = vmatpush.msra.mxu0 0.0
    %679 = vmatpush.msra.mxu0 0.0
    %680 = vmatpush.msra.mxu0 %v80
    %681 = vmatpush.msra.mxu0 %v76
    %682 = vmatpush.msra.mxu0 %v72
    %683 = vmatpush.msra.mxu0 %v68
    %684 = vmatpush.msra.mxu0 %v64
    %685 = vmatpush.msra.mxu0 %v60
    %686 = vmatpush.msra.mxu0 %v56
    %687 = vmatpush.msra.mxu0 %v52
    %688 = vmatmul.f32.gmra.mxu0 %v630
    %v689 = vpop.f32.mrf.mxu0
    %v690 = vadd.f32 0.0, %v689
    %691 = vdwg.mxu0
    %692 = vmatpush.msra.mxu0 0.0
    %693 = vmatpush.msra.mxu0 0.0
    %694 = vmatpush.msra.mxu0 0.0
    %695 = vmatpush.msra.mxu0 0.0
    %696 = vmatpush.msra.mxu0 0.0
    %697 = vmatpush.msra.mxu0 0.0
    %698 = vmatpush.msra.mxu0 0.0
    %699 = vmatpush.msra.mxu0 0.0
    %700 = vmatpush.msra.mxu0 %v81
    %701 = vmatpush.msra.mxu0 %v77
    %702 = vmatpush.msra.mxu0 %v73
    %703 = vmatpush.msra.mxu0 %v69
    %704 = vmatpush.msra.mxu0 %v65
    %705 = vmatpush.msra.mxu0 %v61
    %706 = vmatpush.msra.mxu0 %v57
    %707 = vmatpush.msra.mxu0 %v53
    %708 = vmatmul.f32.gmra.mxu0 %v630
    %v709 = vpop.f32.mrf.mxu0
    %v710 = vadd.f32 0.0, %v709
    %711 = vdwg.mxu0
    %v716 = vrot.slane %v670, 6
    %v717 = vrot.slane %v690, 4
    %v718 = vrot.slane %v710, 2
    %v719 = vsel %vm176, %v650, %v716
    %v720 = vsel %vm178, %v717, %v718
    %v721 = vsel %vm180, %v719, %v720
    %v723 = vadd.f32 %v628, %v721
    %v724 = vadd.f32 %v723, %v194
    %v725 = vxor.u32 %v724, 2147483648
    %v726 = vmul.f32 %v725, 1.442695
    %v727 = vpow.pop %v726
    %v728 = vadd.f32 %v727, 1.0
    %v729 = vrcp.pop %v728
    %v730 = vmul.f32 %v728, %v729
    %v731 = vsub.f32 1.0, %v730
    %v732 = vmul.f32 %v729, %v731
    %v733 = vadd.f32 %v729, %v732
    %vm734 = vweird.f32 %v728
    %vm735 = vweird.f32 %v729
    %vm736 = vmor %vm734, %vm735
    %v737 = vsel %vm736, %v729, %v733
    %v738 = vand.u32 2147483647, %v728
    %vm739 = vcmp.eq.f32.partialorder %v738, 8.507059e+37
    %v740 = vand.u32 %v728, 2147483648
    %v741 = vor.u32 1.1754944e-38, %v740
    %v742 = vsel %vm739, %v741, %v737
    %v743 = vmul.f32 1.0, %v742
    %v745 = vrot.slane %v724, 2
    %v747 = vxor.u32 %v745, 2147483648
    %v748 = vmul.f32 %v747, 1.442695
    %v749 = vpow.pop %v748
    %v750 = vadd.f32 %v749, 1.0
    %v751 = vrcp.pop %v750
    %v752 = vmul.f32 %v750, %v751
    %v753 = vsub.f32 1.0, %v752
    %v754 = vmul.f32 %v751, %v753
    %v755 = vadd.f32 %v751, %v754
    %vm756 = vweird.f32 %v750
    %vm757 = vweird.f32 %v751
    %vm758 = vmor %vm756, %vm757
    %v759 = vsel %vm758, %v751, %v755
    %v760 = vand.u32 2147483647, %v750
    %vm761 = vcmp.eq.f32.partialorder %v760, 8.507059e+37
    %v762 = vand.u32 %v750, 2147483648
    %v763 = vor.u32 1.1754944e-38, %v762
    %v764 = vsel %vm761, %v763, %v759
    %v765 = vmul.f32 1.0, %v764
    %v766 = vrot.slane %v724, 4
    %v768 = vtanh.pop %v766
    %v769 = vrot.slane %v724, 6
    %v771 = vxor.u32 %v769, 2147483648
    %v772 = vmul.f32 %v771, 1.442695
    %v773 = vpow.pop %v772
    %v774 = vadd.f32 %v773, 1.0
    %v775 = vrcp.pop %v774
    %v776 = vmul.f32 %v774, %v775
    %v777 = vsub.f32 1.0, %v776
    %v778 = vmul.f32 %v775, %v777
    %v779 = vadd.f32 %v775, %v778
    %vm780 = vweird.f32 %v774
    %vm781 = vweird.f32 %v775
    %vm782 = vmor %vm780, %vm781
    %v783 = vsel %vm782, %v775, %v779
    %v784 = vand.u32 2147483647, %v774
    %vm785 = vcmp.eq.f32.partialorder %v784, 8.507059e+37
    %v786 = vand.u32 %v774, 2147483648
    %v787 = vor.u32 1.1754944e-38, %v786
    %v788 = vsel %vm785, %v787, %v783
    %v789 = vmul.f32 1.0, %v788
    %v790 = vmul.f32 %v765, %v626
    %v791 = vmul.f32 %v743, %v768
    %v792 = vadd.f32 %v790, %v791
    %v793 = vtanh.pop %v792
    %v794 = vmul.f32 %v789, %v793
    %vm795 = vcmp.gt.s32.totalorder %v83, 3
    %v796 = vsel %vm795, 1, 0
    %797 = vset.pattern.permute.xlu0 0
    %798 = vperm.xlu0 %797, %v796
    %v799 = vpop.permute.xlu0 %798
    %vm800 = vcmp.eq.s32.totalorder %v799, 1
    %v801 = vsel %vm800, %v794, %v625
    %v802 = vsel %vm800, %v792, %v626
    %s803 = scalar_lea.vmem [#allocation2], 32
    %v804 = vld [vmem:[%s803] sm:$0xff]
    %v806 = vsel %vm85, %v801, 0
    %808 = vmatpush.msra.mxu0 0.0
    %809 = vmatpush.msra.mxu0 0.0
    %810 = vmatpush.msra.mxu0 0.0
    %811 = vmatpush.msra.mxu0 0.0
    %812 = vmatpush.msra.mxu0 0.0
    %813 = vmatpush.msra.mxu0 0.0
    %814 = vmatpush.msra.mxu0 0.0
    %815 = vmatpush.msra.mxu0 0.0
    %816 = vmatpush.msra.mxu0 %v78
    %817 = vmatpush.msra.mxu0 %v74
    %818 = vmatpush.msra.mxu0 %v70
    %819 = vmatpush.msra.mxu0 %v66
    %820 = vmatpush.msra.mxu0 %v62
    %821 = vmatpush.msra.mxu0 %v58
    %822 = vmatpush.msra.mxu0 %v54
    %823 = vmatpush.msra.mxu0 %v50
    %824 = vmatmul.f32.gmra.mxu0 %v806
    %v825 = vpop.f32.mrf.mxu0
    %v826 = vadd.f32 0.0, %v825
    %827 = vdwg.mxu0
    %828 = vmatpush.msra.mxu0 0.0
    %829 = vmatpush.msra.mxu0 0.0
    %830 = vmatpush.msra.mxu0 0.0
    %831 = vmatpush.msra.mxu0 0.0
    %832 = vmatpush.msra.mxu0 0.0
    %833 = vmatpush.msra.mxu0 0.0
    %834 = vmatpush.msra.mxu0 0.0
    %835 = vmatpush.msra.mxu0 0.0
    %836 = vmatpush.msra.mxu0 %v79
    %837 = vmatpush.msra.mxu0 %v75
    %838 = vmatpush.msra.mxu0 %v71
    %839 = vmatpush.msra.mxu0 %v67
    %840 = vmatpush.msra.mxu0 %v63
    %841 = vmatpush.msra.mxu0 %v59
    %842 = vmatpush.msra.mxu0 %v55
    %843 = vmatpush.msra.mxu0 %v51
    %844 = vmatmul.f32.gmra.mxu0 %v806
    %v845 = vpop.f32.mrf.mxu0
    %v846 = vadd.f32 0.0, %v845
    %847 = vdwg.mxu0
    %848 = vmatpush.msra.mxu0 0.0
    %849 = vmatpush.msra.mxu0 0.0
    %850 = vmatpush.msra.mxu0 0.0
    %851 = vmatpush.msra.mxu0 0.0
    %852 = vmatpush.msra.mxu0 0.0
    %853 = vmatpush.msra.mxu0 0.0
    %854 = vmatpush.msra.mxu0 0.0
    %855 = vmatpush.msra.mxu0 0.0
    %856 = vmatpush.msra.mxu0 %v80
    %857 = vmatpush.msra.mxu0 %v76
    %858 = vmatpush.msra.mxu0 %v72
    %859 = vmatpush.msra.mxu0 %v68
    %860 = vmatpush.msra.mxu0 %v64
    %861 = vmatpush.msra.mxu0 %v60
    %862 = vmatpush.msra.mxu0 %v56
    %863 = vmatpush.msra.mxu0 %v52
    %864 = vmatmul.f32.gmra.mxu0 %v806
    %v865 = vpop.f32.mrf.mxu0
    %v866 = vadd.f32 0.0, %v865
    %867 = vdwg.mxu0
    %868 = vmatpush.msra.mxu0 0.0
    %869 = vmatpush.msra.mxu0 0.0
    %870 = vmatpush.msra.mxu0 0.0
    %871 = vmatpush.msra.mxu0 0.0
    %872 = vmatpush.msra.mxu0 0.0
    %873 = vmatpush.msra.mxu0 0.0
    %874 = vmatpush.msra.mxu0 0.0
    %875 = vmatpush.msra.mxu0 0.0
    %876 = vmatpush.msra.mxu0 %v81
    %877 = vmatpush.msra.mxu0 %v77
    %878 = vmatpush.msra.mxu0 %v73
    %879 = vmatpush.msra.mxu0 %v69
    %880 = vmatpush.msra.mxu0 %v65
    %881 = vmatpush.msra.mxu0 %v61
    %882 = vmatpush.msra.mxu0 %v57
    %883 = vmatpush.msra.mxu0 %v53
    %884 = vmatmul.f32.gmra.mxu0 %v806
    %v885 = vpop.f32.mrf.mxu0
    %v886 = vadd.f32 0.0, %v885
    %887 = vdwg.mxu0
    %v892 = vrot.slane %v846, 6
    %v893 = vrot.slane %v866, 4
    %v894 = vrot.slane %v886, 2
    %v895 = vsel %vm176, %v826, %v892
    %v896 = vsel %vm178, %v893, %v894
    %v897 = vsel %vm180, %v895, %v896
    %v899 = vadd.f32 %v804, %v897
    %v900 = vadd.f32 %v899, %v194
    %v901 = vxor.u32 %v900, 2147483648
    %v902 = vmul.f32 %v901, 1.442695
    %v903 = vpow.pop %v902
    %v904 = vadd.f32 %v903, 1.0
    %v905 = vrcp.pop %v904
    %v906 = vmul.f32 %v904, %v905
    %v907 = vsub.f32 1.0, %v906
    %v908 = vmul.f32 %v905, %v907
    %v909 = vadd.f32 %v905, %v908
    %vm910 = vweird.f32 %v904
    %vm911 = vweird.f32 %v905
    %vm912 = vmor %vm910, %vm911
    %v913 = vsel %vm912, %v905, %v909
    %v914 = vand.u32 2147483647, %v904
    %vm915 = vcmp.eq.f32.partialorder %v914, 8.507059e+37
    %v916 = vand.u32 %v904, 2147483648
    %v917 = vor.u32 1.1754944e-38, %v916
    %v918 = vsel %vm915, %v917, %v913
    %v919 = vmul.f32 1.0, %v918
    %v921 = vrot.slane %v900, 2
    %v923 = vxor.u32 %v921, 2147483648
    %v924 = vmul.f32 %v923, 1.442695
    %v925 = vpow.pop %v924
    %v926 = vadd.f32 %v925, 1.0
    %v927 = vrcp.pop %v926
    %v928 = vmul.f32 %v926, %v927
    %v929 = vsub.f32 1.0, %v928
    %v930 = vmul.f32 %v927, %v929
    %v931 = vadd.f32 %v927, %v930
    %vm932 = vweird.f32 %v926
    %vm933 = vweird.f32 %v927
    %vm934 = vmor %vm932, %vm933
    %v935 = vsel %vm934, %v927, %v931
    %v936 = vand.u32 2147483647, %v926
    %vm937 = vcmp.eq.f32.partialorder %v936, 8.507059e+37
    %v938 = vand.u32 %v926, 2147483648
    %v939 = vor.u32 1.1754944e-38, %v938
    %v940 = vsel %vm937, %v939, %v935
    %v941 = vmul.f32 1.0, %v940
    %v942 = vrot.slane %v900, 4
    %v944 = vtanh.pop %v942
    %v945 = vrot.slane %v900, 6
    %v947 = vxor.u32 %v945, 2147483648
    %v948 = vmul.f32 %v947, 1.442695
    %v949 = vpow.pop %v948
    %v950 = vadd.f32 %v949, 1.0
    %v951 = vrcp.pop %v950
    %v952 = vmul.f32 %v950, %v951
    %v953 = vsub.f32 1.0, %v952
    %v954 = vmul.f32 %v951, %v953
    %v955 = vadd.f32 %v951, %v954
    %vm956 = vweird.f32 %v950
    %vm957 = vweird.f32 %v951
    %vm958 = vmor %vm956, %vm957
    %v959 = vsel %vm958, %v951, %v955
    %v960 = vand.u32 2147483647, %v950
    %vm961 = vcmp.eq.f32.partialorder %v960, 8.507059e+37
    %v962 = vand.u32 %v950, 2147483648
    %v963 = vor.u32 1.1754944e-38, %v962
    %v964 = vsel %vm961, %v963, %v959
    %v965 = vmul.f32 1.0, %v964
    %v966 = vmul.f32 %v941, %v802
    %v967 = vmul.f32 %v919, %v944
    %v968 = vadd.f32 %v966, %v967
    %v969 = vtanh.pop %v968
    %v970 = vmul.f32 %v965, %v969
    %vm971 = vcmp.gt.s32.totalorder %v83, 4
    %v972 = vsel %vm971, 1, 0
    %973 = vset.pattern.permute.xlu0 0
    %974 = vperm.xlu0 %973, %v972
    %v975 = vpop.permute.xlu0 %974
    %vm976 = vcmp.eq.s32.totalorder %v975, 1
    %v977 = vsel %vm976, %v970, %v801
    %v978 = vsel %vm976, %v968, %v802
    %s979 = scalar_lea.vmem [#allocation2], 40
    %v980 = vld [vmem:[%s979] sm:$0xff]
    %v982 = vsel %vm85, %v977, 0
    %984 = vmatpush.msra.mxu0 0.0
    %985 = vmatpush.msra.mxu0 0.0
    %986 = vmatpush.msra.mxu0 0.0
    %987 = vmatpush.msra.mxu0 0.0
    %988 = vmatpush.msra.mxu0 0.0
    %989 = vmatpush.msra.mxu0 0.0
    %990 = vmatpush.msra.mxu0 0.0
    %991 = vmatpush.msra.mxu0 0.0
    %992 = vmatpush.msra.mxu0 %v78
    %993 = vmatpush.msra.mxu0 %v74
    %994 = vmatpush.msra.mxu0 %v70
    %995 = vmatpush.msra.mxu0 %v66
    %996 = vmatpush.msra.mxu0 %v62
    %997 = vmatpush.msra.mxu0 %v58
    %998 = vmatpush.msra.mxu0 %v54
    %999 = vmatpush.msra.mxu0 %v50
    %1000 = vmatmul.f32.gmra.mxu0 %v982
    %v1001 = vpop.f32.mrf.mxu0
    %v1002 = vadd.f32 0.0, %v1001
    %1003 = vdwg.mxu0
    %1004 = vmatpush.msra.mxu0 0.0
    %1005 = vmatpush.msra.mxu0 0.0
    %1006 = vmatpush.msra.mxu0 0.0
    %1007 = vmatpush.msra.mxu0 0.0
    %1008 = vmatpush.msra.mxu0 0.0
    %1009 = vmatpush.msra.mxu0 0.0
    %1010 = vmatpush.msra.mxu0 0.0
    %1011 = vmatpush.msra.mxu0 0.0
    %1012 = vmatpush.msra.mxu0 %v79
    %1013 = vmatpush.msra.mxu0 %v75
    %1014 = vmatpush.msra.mxu0 %v71
    %1015 = vmatpush.msra.mxu0 %v67
    %1016 = vmatpush.msra.mxu0 %v63
    %1017 = vmatpush.msra.mxu0 %v59
    %1018 = vmatpush.msra.mxu0 %v55
    %1019 = vmatpush.msra.mxu0 %v51
    %1020 = vmatmul.f32.gmra.mxu0 %v982
    %v1021 = vpop.f32.mrf.mxu0
    %v1022 = vadd.f32 0.0, %v1021
    %1023 = vdwg.mxu0
    %1024 = vmatpush.msra.mxu0 0.0
    %1025 = vmatpush.msra.mxu0 0.0
    %1026 = vmatpush.msra.mxu0 0.0
    %1027 = vmatpush.msra.mxu0 0.0
    %1028 = vmatpush.msra.mxu0 0.0
    %1029 = vmatpush.msra.mxu0 0.0
    %1030 = vmatpush.msra.mxu0 0.0
    %1031 = vmatpush.msra.mxu0 0.0
    %1032 = vmatpush.msra.mxu0 %v80
    %1033 = vmatpush.msra.mxu0 %v76
    %1034 = vmatpush.msra.mxu0 %v72
    %1035 = vmatpush.msra.mxu0 %v68
    %1036 = vmatpush.msra.mxu0 %v64
    %1037 = vmatpush.msra.mxu0 %v60
    %1038 = vmatpush.msra.mxu0 %v56
    %1039 = vmatpush.msra.mxu0 %v52
    %1040 = vmatmul.f32.gmra.mxu0 %v982
    %v1041 = vpop.f32.mrf.mxu0
    %v1042 = vadd.f32 0.0, %v1041
    %1043 = vdwg.mxu0
    %1044 = vmatpush.msra.mxu0 0.0
    %1045 = vmatpush.msra.mxu0 0.0
    %1046 = vmatpush.msra.mxu0 0.0
    %1047 = vmatpush.msra.mxu0 0.0
    %1048 = vmatpush.msra.mxu0 0.0
    %1049 = vmatpush.msra.mxu0 0.0
    %1050 = vmatpush.msra.mxu0 0.0
    %1051 = vmatpush.msra.mxu0 0.0
    %1052 = vmatpush.msra.mxu0 %v81
    %1053 = vmatpush.msra.mxu0 %v77
    %1054 = vmatpush.msra.mxu0 %v73
    %1055 = vmatpush.msra.mxu0 %v69
    %1056 = vmatpush.msra.mxu0 %v65
    %1057 = vmatpush.msra.mxu0 %v61
    %1058 = vmatpush.msra.mxu0 %v57
    %1059 = vmatpush.msra.mxu0 %v53
    %1060 = vmatmul.f32.gmra.mxu0 %v982
    %v1061 = vpop.f32.mrf.mxu0
    %v1062 = vadd.f32 0.0, %v1061
    %1063 = vdwg.mxu0
    %v1068 = vrot.slane %v1022, 6
    %v1069 = vrot.slane %v1042, 4
    %v1070 = vrot.slane %v1062, 2
    %v1071 = vsel %vm176, %v1002, %v1068
    %v1072 = vsel %vm178, %v1069, %v1070
    %v1073 = vsel %vm180, %v1071, %v1072
    %v1075 = vadd.f32 %v980, %v1073
    %v1076 = vadd.f32 %v1075, %v194
    %v1077 = vxor.u32 %v1076, 2147483648
    %v1078 = vmul.f32 %v1077, 1.442695
    %v1079 = vpow.pop %v1078
    %v1080 = vadd.f32 %v1079, 1.0
    %v1081 = vrcp.pop %v1080
    %v1082 = vmul.f32 %v1080, %v1081
    %v1083 = vsub.f32 1.0, %v1082
    %v1084 = vmul.f32 %v1081, %v1083
    %v1085 = vadd.f32 %v1081, %v1084
    %vm1086 = vweird.f32 %v1080
    %vm1087 = vweird.f32 %v1081
    %vm1088 = vmor %vm1086, %vm1087
    %v1089 = vsel %vm1088, %v1081, %v1085
    %v1090 = vand.u32 2147483647, %v1080
    %vm1091 = vcmp.eq.f32.partialorder %v1090, 8.507059e+37
    %v1092 = vand.u32 %v1080, 2147483648
    %v1093 = vor.u32 1.1754944e-38, %v1092
    %v1094 = vsel %vm1091, %v1093, %v1089
    %v1095 = vmul.f32 1.0, %v1094
    %v1097 = vrot.slane %v1076, 2
    %v1099 = vxor.u32 %v1097, 2147483648
    %v1100 = vmul.f32 %v1099, 1.442695
    %v1101 = vpow.pop %v1100
    %v1102 = vadd.f32 %v1101, 1.0
    %v1103 = vrcp.pop %v1102
    %v1104 = vmul.f32 %v1102, %v1103
    %v1105 = vsub.f32 1.0, %v1104
    %v1106 = vmul.f32 %v1103, %v1105
    %v1107 = vadd.f32 %v1103, %v1106
    %vm1108 = vweird.f32 %v1102
    %vm1109 = vweird.f32 %v1103
    %vm1110 = vmor %vm1108, %vm1109
    %v1111 = vsel %vm1110, %v1103, %v1107
    %v1112 = vand.u32 2147483647, %v1102
    %vm1113 = vcmp.eq.f32.partialorder %v1112, 8.507059e+37
    %v1114 = vand.u32 %v1102, 2147483648
    %v1115 = vor.u32 1.1754944e-38, %v1114
    %v1116 = vsel %vm1113, %v1115, %v1111
    %v1117 = vmul.f32 1.0, %v1116
    %v1118 = vrot.slane %v1076, 4
    %v1120 = vtanh.pop %v1118
    %v1121 = vrot.slane %v1076, 6
    %v1123 = vxor.u32 %v1121, 2147483648
    %v1124 = vmul.f32 %v1123, 1.442695
    %v1125 = vpow.pop %v1124
    %v1126 = vadd.f32 %v1125, 1.0
    %v1127 = vrcp.pop %v1126
    %v1128 = vmul.f32 %v1126, %v1127
    %v1129 = vsub.f32 1.0, %v1128
    %v1130 = vmul.f32 %v1127, %v1129
    %v1131 = vadd.f32 %v1127, %v1130
    %vm1132 = vweird.f32 %v1126
    %vm1133 = vweird.f32 %v1127
    %vm1134 = vmor %vm1132, %vm1133
    %v1135 = vsel %vm1134, %v1127, %v1131
    %v1136 = vand.u32 2147483647, %v1126
    %vm1137 = vcmp.eq.f32.partialorder %v1136, 8.507059e+37
    %v1138 = vand.u32 %v1126, 2147483648
    %v1139 = vor.u32 1.1754944e-38, %v1138
    %v1140 = vsel %vm1137, %v1139, %v1135
    %v1141 = vmul.f32 1.0, %v1140
    %v1142 = vmul.f32 %v1117, %v978
    %v1143 = vmul.f32 %v1095, %v1120
    %v1144 = vadd.f32 %v1142, %v1143
    %v1145 = vtanh.pop %v1144
    %v1146 = vmul.f32 %v1141, %v1145
    %vm1147 = vcmp.gt.s32.totalorder %v83, 5
    %v1148 = vsel %vm1147, 1, 0
    %1149 = vset.pattern.permute.xlu0 0
    %1150 = vperm.xlu0 %1149, %v1148
    %v1151 = vpop.permute.xlu0 %1150
    %vm1152 = vcmp.eq.s32.totalorder %v1151, 1
    %v1153 = vsel %vm1152, %v1146, %v977
    %v1154 = vsel %vm1152, %v1144, %v978
    %s1155 = scalar_lea.vmem [#allocation2], 48
    %v1156 = vld [vmem:[%s1155] sm:$0xff]
    %v1158 = vsel %vm85, %v1153, 0
    %1160 = vmatpush.msra.mxu0 0.0
    %1161 = vmatpush.msra.mxu0 0.0
    %1162 = vmatpush.msra.mxu0 0.0
    %1163 = vmatpush.msra.mxu0 0.0
    %1164 = vmatpush.msra.mxu0 0.0
    %1165 = vmatpush.msra.mxu0 0.0
    %1166 = vmatpush.msra.mxu0 0.0
    %1167 = vmatpush.msra.mxu0 0.0
    %1168 = vmatpush.msra.mxu0 %v78
    %1169 = vmatpush.msra.mxu0 %v74
    %1170 = vmatpush.msra.mxu0 %v70
    %1171 = vmatpush.msra.mxu0 %v66
    %1172 = vmatpush.msra.mxu0 %v62
    %1173 = vmatpush.msra.mxu0 %v58
    %1174 = vmatpush.msra.mxu0 %v54
    %1175 = vmatpush.msra.mxu0 %v50
    %1176 = vmatmul.f32.gmra.mxu0 %v1158
    %v1177 = vpop.f32.mrf.mxu0
    %v1178 = vadd.f32 0.0, %v1177
    %1179 = vdwg.mxu0
    %1180 = vmatpush.msra.mxu0 0.0
    %1181 = vmatpush.msra.mxu0 0.0
    %1182 = vmatpush.msra.mxu0 0.0
    %1183 = vmatpush.msra.mxu0 0.0
    %1184 = vmatpush.msra.mxu0 0.0
    %1185 = vmatpush.msra.mxu0 0.0
    %1186 = vmatpush.msra.mxu0 0.0
    %1187 = vmatpush.msra.mxu0 0.0
    %1188 = vmatpush.msra.mxu0 %v79
    %1189 = vmatpush.msra.mxu0 %v75
    %1190 = vmatpush.msra.mxu0 %v71
    %1191 = vmatpush.msra.mxu0 %v67
    %1192 = vmatpush.msra.mxu0 %v63
    %1193 = vmatpush.msra.mxu0 %v59
    %1194 = vmatpush.msra.mxu0 %v55
    %1195 = vmatpush.msra.mxu0 %v51
    %1196 = vmatmul.f32.gmra.mxu0 %v1158
    %v1197 = vpop.f32.mrf.mxu0
    %v1198 = vadd.f32 0.0, %v1197
    %1199 = vdwg.mxu0
    %1200 = vmatpush.msra.mxu0 0.0
    %1201 = vmatpush.msra.mxu0 0.0
    %1202 = vmatpush.msra.mxu0 0.0
    %1203 = vmatpush.msra.mxu0 0.0
    %1204 = vmatpush.msra.mxu0 0.0
    %1205 = vmatpush.msra.mxu0 0.0
    %1206 = vmatpush.msra.mxu0 0.0
    %1207 = vmatpush.msra.mxu0 0.0
    %1208 = vmatpush.msra.mxu0 %v80
    %1209 = vmatpush.msra.mxu0 %v76
    %1210 = vmatpush.msra.mxu0 %v72
    %1211 = vmatpush.msra.mxu0 %v68
    %1212 = vmatpush.msra.mxu0 %v64
    %1213 = vmatpush.msra.mxu0 %v60
    %1214 = vmatpush.msra.mxu0 %v56
    %1215 = vmatpush.msra.mxu0 %v52
    %1216 = vmatmul.f32.gmra.mxu0 %v1158
    %v1217 = vpop.f32.mrf.mxu0
    %v1218 = vadd.f32 0.0, %v1217
    %1219 = vdwg.mxu0
    %1220 = vmatpush.msra.mxu0 0.0
    %1221 = vmatpush.msra.mxu0 0.0
    %1222 = vmatpush.msra.mxu0 0.0
    %1223 = vmatpush.msra.mxu0 0.0
    %1224 = vmatpush.msra.mxu0 0.0
    %1225 = vmatpush.msra.mxu0 0.0
    %1226 = vmatpush.msra.mxu0 0.0
    %1227 = vmatpush.msra.mxu0 0.0
    %1228 = vmatpush.msra.mxu0 %v81
    %1229 = vmatpush.msra.mxu0 %v77
    %1230 = vmatpush.msra.mxu0 %v73
    %1231 = vmatpush.msra.mxu0 %v69
    %1232 = vmatpush.msra.mxu0 %v65
    %1233 = vmatpush.msra.mxu0 %v61
    %1234 = vmatpush.msra.mxu0 %v57
    %1235 = vmatpush.msra.mxu0 %v53
    %1236 = vmatmul.f32.gmra.mxu0 %v1158
    %v1237 = vpop.f32.mrf.mxu0
    %v1238 = vadd.f32 0.0, %v1237
    %1239 = vdwg.mxu0
    %v1244 = vrot.slane %v1198, 6
    %v1245 = vrot.slane %v1218, 4
    %v1246 = vrot.slane %v1238, 2
    %v1247 = vsel %vm176, %v1178, %v1244
    %v1248 = vsel %vm178, %v1245, %v1246
    %v1249 = vsel %vm180, %v1247, %v1248
    %v1251 = vadd.f32 %v1156, %v1249
    %v1252 = vadd.f32 %v1251, %v194
    %v1253 = vxor.u32 %v1252, 2147483648
    %v1254 = vmul.f32 %v1253, 1.442695
    %v1255 = vpow.pop %v1254
    %v1256 = vadd.f32 %v1255, 1.0
    %v1257 = vrcp.pop %v1256
    %v1258 = vmul.f32 %v1256, %v1257
    %v1259 = vsub.f32 1.0, %v1258
    %v1260 = vmul.f32 %v1257, %v1259
    %v1261 = vadd.f32 %v1257, %v1260
    %vm1262 = vweird.f32 %v1256
    %vm1263 = vweird.f32 %v1257
    %vm1264 = vmor %vm1262, %vm1263
    %v1265 = vsel %vm1264, %v1257, %v1261
    %v1266 = vand.u32 2147483647, %v1256
    %vm1267 = vcmp.eq.f32.partialorder %v1266, 8.507059e+37
    %v1268 = vand.u32 %v1256, 2147483648
    %v1269 = vor.u32 1.1754944e-38, %v1268
    %v1270 = vsel %vm1267, %v1269, %v1265
    %v1271 = vmul.f32 1.0, %v1270
    %v1273 = vrot.slane %v1252, 2
    %v1275 = vxor.u32 %v1273, 2147483648
    %v1276 = vmul.f32 %v1275, 1.442695
    %v1277 = vpow.pop %v1276
    %v1278 = vadd.f32 %v1277, 1.0
    %v1279 = vrcp.pop %v1278
    %v1280 = vmul.f32 %v1278, %v1279
    %v1281 = vsub.f32 1.0, %v1280
    %v1282 = vmul.f32 %v1279, %v1281
    %v1283 = vadd.f32 %v1279, %v1282
    %vm1284 = vweird.f32 %v1278
    %vm1285 = vweird.f32 %v1279
    %vm1286 = vmor %vm1284, %vm1285
    %v1287 = vsel %vm1286, %v1279, %v1283
    %v1288 = vand.u32 2147483647, %v1278
    %vm1289 = vcmp.eq.f32.partialorder %v1288, 8.507059e+37
    %v1290 = vand.u32 %v1278, 2147483648
    %v1291 = vor.u32 1.1754944e-38, %v1290
    %v1292 = vsel %vm1289, %v1291, %v1287
    %v1293 = vmul.f32 1.0, %v1292
    %v1294 = vrot.slane %v1252, 4
    %v1296 = vtanh.pop %v1294
    %v1297 = vrot.slane %v1252, 6
    %v1299 = vxor.u32 %v1297, 2147483648
    %v1300 = vmul.f32 %v1299, 1.442695
    %v1301 = vpow.pop %v1300
    %v1302 = vadd.f32 %v1301, 1.0
    %v1303 = vrcp.pop %v1302
    %v1304 = vmul.f32 %v1302, %v1303
    %v1305 = vsub.f32 1.0, %v1304
    %v1306 = vmul.f32 %v1303, %v1305
    %v1307 = vadd.f32 %v1303, %v1306
    %vm1308 = vweird.f32 %v1302
    %vm1309 = vweird.f32 %v1303
    %vm1310 = vmor %vm1308, %vm1309
    %v1311 = vsel %vm1310, %v1303, %v1307
    %v1312 = vand.u32 2147483647, %v1302
    %vm1313 = vcmp.eq.f32.partialorder %v1312, 8.507059e+37
    %v1314 = vand.u32 %v1302, 2147483648
    %v1315 = vor.u32 1.1754944e-38, %v1314
    %v1316 = vsel %vm1313, %v1315, %v1311
    %v1317 = vmul.f32 1.0, %v1316
    %v1318 = vmul.f32 %v1293, %v1154
    %v1319 = vmul.f32 %v1271, %v1296
    %v1320 = vadd.f32 %v1318, %v1319
    %v1321 = vtanh.pop %v1320
    %v1322 = vmul.f32 %v1317, %v1321
    %vm1323 = vcmp.gt.s32.totalorder %v83, 6
    %v1324 = vsel %vm1323, 1, 0
    %1325 = vset.pattern.permute.xlu0 0
    %1326 = vperm.xlu0 %1325, %v1324
    %v1327 = vpop.permute.xlu0 %1326
    %vm1328 = vcmp.eq.s32.totalorder %v1327, 1
    %v1329 = vsel %vm1328, %v1322, %v1153
    %v1330 = vsel %vm1328, %v1320, %v1154
    %s1331 = scalar_lea.vmem [#allocation2], 56
    %v1332 = vld [vmem:[%s1331] sm:$0xff]
    %v1334 = vsel %vm85, %v1329, 0
    %1336 = vmatpush.msra.mxu0 0.0
    %1337 = vmatpush.msra.mxu0 0.0
    %1338 = vmatpush.msra.mxu0 0.0
    %1339 = vmatpush.msra.mxu0 0.0
    %1340 = vmatpush.msra.mxu0 0.0
    %1341 = vmatpush.msra.mxu0 0.0
    %1342 = vmatpush.msra.mxu0 0.0
    %1343 = vmatpush.msra.mxu0 0.0
    %1344 = vmatpush.msra.mxu0 %v78
    %1345 = vmatpush.msra.mxu0 %v74
    %1346 = vmatpush.msra.mxu0 %v70
    %1347 = vmatpush.msra.mxu0 %v66
    %1348 = vmatpush.msra.mxu0 %v62
    %1349 = vmatpush.msra.mxu0 %v58
    %1350 = vmatpush.msra.mxu0 %v54
    %1351 = vmatpush.msra.mxu0 %v50
    %1352 = vmatmul.f32.gmra.mxu0 %v1334
    %v1353 = vpop.f32.mrf.mxu0
    %v1354 = vadd.f32 0.0, %v1353
    %1355 = vdwg.mxu0
    %1356 = vmatpush.msra.mxu0 0.0
    %1357 = vmatpush.msra.mxu0 0.0
    %1358 = vmatpush.msra.mxu0 0.0
    %1359 = vmatpush.msra.mxu0 0.0
    %1360 = vmatpush.msra.mxu0 0.0
    %1361 = vmatpush.msra.mxu0 0.0
    %1362 = vmatpush.msra.mxu0 0.0
    %1363 = vmatpush.msra.mxu0 0.0
    %1364 = vmatpush.msra.mxu0 %v79
    %1365 = vmatpush.msra.mxu0 %v75
    %1366 = vmatpush.msra.mxu0 %v71
    %1367 = vmatpush.msra.mxu0 %v67
    %1368 = vmatpush.msra.mxu0 %v63
    %1369 = vmatpush.msra.mxu0 %v59
    %1370 = vmatpush.msra.mxu0 %v55
    %1371 = vmatpush.msra.mxu0 %v51
    %1372 = vmatmul.f32.gmra.mxu0 %v1334
    %v1373 = vpop.f32.mrf.mxu0
    %v1374 = vadd.f32 0.0, %v1373
    %1375 = vdwg.mxu0
    %1376 = vmatpush.msra.mxu0 0.0
    %1377 = vmatpush.msra.mxu0 0.0
    %1378 = vmatpush.msra.mxu0 0.0
    %1379 = vmatpush.msra.mxu0 0.0
    %1380 = vmatpush.msra.mxu0 0.0
    %1381 = vmatpush.msra.mxu0 0.0
    %1382 = vmatpush.msra.mxu0 0.0
    %1383 = vmatpush.msra.mxu0 0.0
    %1384 = vmatpush.msra.mxu0 %v80
    %1385 = vmatpush.msra.mxu0 %v76
    %1386 = vmatpush.msra.mxu0 %v72
    %1387 = vmatpush.msra.mxu0 %v68
    %1388 = vmatpush.msra.mxu0 %v64
    %1389 = vmatpush.msra.mxu0 %v60
    %1390 = vmatpush.msra.mxu0 %v56
    %1391 = vmatpush.msra.mxu0 %v52
    %1392 = vmatmul.f32.gmra.mxu0 %v1334
    %v1393 = vpop.f32.mrf.mxu0
    %v1394 = vadd.f32 0.0, %v1393
    %1395 = vdwg.mxu0
    %1396 = vmatpush.msra.mxu0 0.0
    %1397 = vmatpush.msra.mxu0 0.0
    %1398 = vmatpush.msra.mxu0 0.0
    %1399 = vmatpush.msra.mxu0 0.0
    %1400 = vmatpush.msra.mxu0 0.0
    %1401 = vmatpush.msra.mxu0 0.0
    %1402 = vmatpush.msra.mxu0 0.0
    %1403 = vmatpush.msra.mxu0 0.0
    %1404 = vmatpush.msra.mxu0 %v81
    %1405 = vmatpush.msra.mxu0 %v77
    %1406 = vmatpush.msra.mxu0 %v73
    %1407 = vmatpush.msra.mxu0 %v69
    %1408 = vmatpush.msra.mxu0 %v65
    %1409 = vmatpush.msra.mxu0 %v61
    %1410 = vmatpush.msra.mxu0 %v57
    %1411 = vmatpush.msra.mxu0 %v53
    %1412 = vmatmul.f32.gmra.mxu0 %v1334
    %v1413 = vpop.f32.mrf.mxu0
    %v1414 = vadd.f32 0.0, %v1413
    %1415 = vdwg.mxu0
    %v1420 = vrot.slane %v1374, 6
    %v1421 = vrot.slane %v1394, 4
    %v1422 = vrot.slane %v1414, 2
    %v1423 = vsel %vm176, %v1354, %v1420
    %v1424 = vsel %vm178, %v1421, %v1422
    %v1425 = vsel %vm180, %v1423, %v1424
    %v1427 = vadd.f32 %v1332, %v1425
    %v1428 = vadd.f32 %v1427, %v194
    %v1429 = vxor.u32 %v1428, 2147483648
    %v1430 = vmul.f32 %v1429, 1.442695
    %v1431 = vpow.pop %v1430
    %v1432 = vadd.f32 %v1431, 1.0
    %v1433 = vrcp.pop %v1432
    %v1434 = vmul.f32 %v1432, %v1433
    %v1435 = vsub.f32 1.0, %v1434
    %v1436 = vmul.f32 %v1433, %v1435
    %v1437 = vadd.f32 %v1433, %v1436
    %vm1438 = vweird.f32 %v1432
    %vm1439 = vweird.f32 %v1433
    %vm1440 = vmor %vm1438, %vm1439
    %v1441 = vsel %vm1440, %v1433, %v1437
    %v1442 = vand.u32 2147483647, %v1432
    %vm1443 = vcmp.eq.f32.partialorder %v1442, 8.507059e+37
    %v1444 = vand.u32 %v1432, 2147483648
    %v1445 = vor.u32 1.1754944e-38, %v1444
    %v1446 = vsel %vm1443, %v1445, %v1441
    %v1447 = vmul.f32 1.0, %v1446
    %v1449 = vrot.slane %v1428, 2
    %v1451 = vxor.u32 %v1449, 2147483648
    %v1452 = vmul.f32 %v1451, 1.442695
    %v1453 = vpow.pop %v1452
    %v1454 = vadd.f32 %v1453, 1.0
    %v1455 = vrcp.pop %v1454
    %v1456 = vmul.f32 %v1454, %v1455
    %v1457 = vsub.f32 1.0, %v1456
    %v1458 = vmul.f32 %v1455, %v1457
    %v1459 = vadd.f32 %v1455, %v1458
    %vm1460 = vweird.f32 %v1454
    %vm1461 = vweird.f32 %v1455
    %vm1462 = vmor %vm1460, %vm1461
    %v1463 = vsel %vm1462, %v1455, %v1459
    %v1464 = vand.u32 2147483647, %v1454
    %vm1465 = vcmp.eq.f32.partialorder %v1464, 8.507059e+37
    %v1466 = vand.u32 %v1454, 2147483648
    %v1467 = vor.u32 1.1754944e-38, %v1466
    %v1468 = vsel %vm1465, %v1467, %v1463
    %v1469 = vmul.f32 1.0, %v1468
    %v1470 = vrot.slane %v1428, 4
    %v1472 = vtanh.pop %v1470
    %v1473 = vrot.slane %v1428, 6
    %v1475 = vxor.u32 %v1473, 2147483648
    %v1476 = vmul.f32 %v1475, 1.442695
    %v1477 = vpow.pop %v1476
    %v1478 = vadd.f32 %v1477, 1.0
    %v1479 = vrcp.pop %v1478
    %v1480 = vmul.f32 %v1478, %v1479
    %v1481 = vsub.f32 1.0, %v1480
    %v1482 = vmul.f32 %v1479, %v1481
    %v1483 = vadd.f32 %v1479, %v1482
    %vm1484 = vweird.f32 %v1478
    %vm1485 = vweird.f32 %v1479
    %vm1486 = vmor %vm1484, %vm1485
    %v1487 = vsel %vm1486, %v1479, %v1483
    %v1488 = vand.u32 2147483647, %v1478
    %vm1489 = vcmp.eq.f32.partialorder %v1488, 8.507059e+37
    %v1490 = vand.u32 %v1478, 2147483648
    %v1491 = vor.u32 1.1754944e-38, %v1490
    %v1492 = vsel %vm1489, %v1491, %v1487
    %v1493 = vmul.f32 1.0, %v1492
    %v1494 = vmul.f32 %v1469, %v1330
    %v1495 = vmul.f32 %v1447, %v1472
    %v1496 = vadd.f32 %v1494, %v1495
    %v1497 = vtanh.pop %v1496
    %v1498 = vmul.f32 %v1493, %v1497
    %vm1499 = vcmp.gt.s32.totalorder %v83, 7
    %v1500 = vsel %vm1499, 1, 0
    %1501 = vset.pattern.permute.xlu0 0
    %1502 = vperm.xlu0 %1501, %v1500
    %v1503 = vpop.permute.xlu0 %1502
    %vm1504 = vcmp.eq.s32.totalorder %v1503, 1
    %v1505 = vsel %vm1504, %v1498, %v1329
    %vm1506 = vcmask 517120
    %1507 = vst.msk [vmem:[#allocation7] sm:$0x3] %vm1506, %v1505
    // Predicated region
    $region26: #{tpu_custom_call.1} parent=1 // pred_check
      _
    $region27: #{tpu_custom_call.1} parent=1 // pred_check_branch
      %1509 = sbr.rel (0) target = $region29
    $region28: #{tpu_custom_call.1} parent=1 // pred_region
      %1511 = vsyncadd [#allocation4], 0
      %s1513 = sshll.u32 [#allocation7], 4
      %s1514 = int_to_ptr.vmem [resolvable:$true] %s1513
      %s1515 = sshll.u32 %s4, 4
      %s1516 = int_to_ptr.hbm [resolvable:$true] %s1515
      %1518 = dma.vmem_to_hbm [thread:$0]  %s1514, 32, %s1516, [#allocation4]
    $region29: #{tpu_custom_call.1} parent=1 // pred_fallthru
      _
    // Predicated region
    $region30: #{tpu_custom_call.1} parent=1 // pred_check
      _
    $region31: #{tpu_custom_call.1} parent=1 // pred_check_branch
      %1520 = sbr.rel (0) target = $region33
    $region32: #{tpu_custom_call.1} parent=1 // pred_region
      %1522 = dma.done [#allocation4], 32
    $region33: #{tpu_custom_call.1} parent=1 // pred_fallthru
      _
    %1523 = vsyncpa [#allocation3], 1
    %1524 = vsyncpa [#allocation6], 1
    %1525 = vsyncpa [#allocation4], 1

</llo_original>
